<compile_context>
chip_gen: v7x
topology: tpu7x:2x2x1
jax: 0.10.0
libtpu: 0.0.40
codegen_flags: <defaults>
</compile_context>

<pallas_src>
import math

import numpy as np

import jax
import jax.numpy as jnp
from jax import lax
from jax.experimental import pallas as pl
from jax.experimental.pallas import tpu as pltpu

# ---- configuration (mirrors Model.__init__ args) ----------------------------
B = 2                  # batch size
MAX_SEQ_LEN = 8        # args.max_seq_len
SEQ = MAX_SEQ_LEN + 1  # self.max_seq_len inside the module
L = MAX_SEQ_LEN        # encoder sequence length (after the [:, :-1] slice)
D = 32                 # args.embedding_dim
H = 2 * D              # FFN hidden width
BL = B * L             # flattened (batch, position) rows
ITEM_NUM = 50
VOCAB = ITEM_NUM + 1   # nn.Embedding(item_num + 1, D)
N_IDS = B * SEQ * 2    # raw item ids per forward call (pos/neg interleaved)
NEG_INF = -1e9


def _layer_norm(x, g, b, eps=1e-12):
    # TODO(synk): eps follows BERT-style 1e-12; torch.nn.LayerNorm default is 1e-5.
    mu = jnp.mean(x, axis=-1, keepdims=True)
    var = jnp.mean((x - mu) ** 2, axis=-1, keepdims=True)
    return (x - mu) * lax.rsqrt(var + eps) * g + b


# -----------------------------------------------------------------------------
# Single fused kernel: embedding gather + SASRec encoder + pos/neg scores +
# masked BCEWithLogits loss.  Everything fits trivially in VMEM (<100 KiB), so
# every operand is a full-array VMEM block and there is no grid.
# -----------------------------------------------------------------------------
def fused_kernel(ids_ref, mask_k_ref, mask_q_ref, table_ref, perm_ref,
                 attn_bias_ref, pos_ref, w_qkvo_ref, b_qkvo_ref,
                 w1_ref, b1_ref, w2_ref, b2_ref, ln_ref, o_ref):
    # TODO(synk): User_Encoder_SASRec source was not provided with the module;
    # this is a canonical single-block, single-head post-LN SASRec transformer
    # (pos-emb -> LN -> causal+padding-masked attention -> FFN(GELU, tanh
    # approx)).  LayerNorm eps and the GELU flavour should be re-checked
    # against the actual reference encoder.
    f32 = jnp.float32

    # --- nn.Embedding gather, fused in-kernel as a one-hot MXU gather --------
    ids = ids_ref[...]                                               # (36,1) i32
    vocab = lax.broadcasted_iota(jnp.int32, (N_IDS, VOCAB), 1)
    onehot = (ids == vocab).astype(f32)                              # (36,51)
    emb_all = jnp.dot(onehot, table_ref[...],
                      preferred_element_type=f32)                    # (36, D)
    # Constant row-selection: rows = [x(16) | target_pos(16) | target_neg(16)]
    emb_sel = jnp.dot(perm_ref[...], emb_all,
                      preferred_element_type=f32)                    # (48, D)
    x = emb_sel[0:BL, :]                # input_logs_embs  (8-aligned slices)
    tpos = emb_sel[BL:2 * BL, :]        # target_pos_embs
    tneg = emb_sel[2 * BL:3 * BL, :]    # target_neg_embs

    # --- SASRec encoder (single block, single head) ---------------------------
    x = x + pos_ref[...]                                             # + pos emb
    h = _layer_norm(x, ln_ref[0:1, :], ln_ref[3:4, :])

    # Three separate matmuls: no lane-offset q/k/v extraction from a QKV slab.
    q = jnp.dot(h, w_qkvo_ref[0], preferred_element_type=f32) + b_qkvo_ref[0:1, :]
    k = jnp.dot(h, w_qkvo_ref[1], preferred_element_type=f32) + b_qkvo_ref[1:2, :]
    v = jnp.dot(h, w_qkvo_ref[2], preferred_element_type=f32) + b_qkvo_ref[2:3, :]

    # q @ k^T without an explicit transpose: contract the last dims on the MXU.
    scores = lax.dot_general(q, k, (((1,), (1,)), ((), ())),
                             preferred_element_type=f32) * (1.0 / math.sqrt(D))
    # Static causal + per-user block-diagonal bias is a precomputed constant
    # input; only the data-dependent key-padding mask is applied at runtime.
    scores = scores + attn_bias_ref[...]
    scores = scores + jnp.where(mask_k_ref[...] != 0.0, 0.0, NEG_INF)

    # Fully-masked (padded) query rows degrade to a uniform distribution; their
    # outputs are excluded from the loss below, so this is harmless.
    scores = scores - jnp.max(scores, axis=-1, keepdims=True)
    e = jnp.exp(scores)
    probs = e * pl.reciprocal(jnp.sum(e, axis=-1, keepdims=True), approx=True)

    attn = jnp.dot(probs, v, preferred_element_type=f32)             # (BL, D)
    attn = (jnp.dot(attn, w_qkvo_ref[3], preferred_element_type=f32)
            + b_qkvo_ref[3:4, :])
    h2 = _layer_norm(h + attn, ln_ref[1:2, :], ln_ref[4:5, :])

    # --- position-wise FFN + residual LN ---------------------------------------
    ffn = jnp.dot(h2, w1_ref[...], preferred_element_type=f32) + b1_ref[...]
    ffn = jax.nn.gelu(ffn)            # tanh approximation (EUP tanh)
    ffn = jnp.dot(ffn, w2_ref[...], preferred_element_type=f32) + b2_ref[...]
    prec = _layer_norm(h2 + ffn, ln_ref[2:3, :], ln_ref[5:6, :])     # (BL, D)

    # --- pos/neg dot-product scores + masked BCEWithLogitsLoss -----------------
    pos_score = jnp.sum(prec * tpos, axis=-1, keepdims=True)         # (BL, 1)
    neg_score = jnp.sum(prec * tneg, axis=-1, keepdims=True)
    m = (mask_q_ref[...] != 0.0).astype(f32)                         # (BL, 1)

    def softplus(z):  # stable log(1+exp(z)); matches BCEWithLogitsLoss pieces
        return jnp.maximum(z, 0.0) + jnp.log(1.0 + jnp.exp(-jnp.abs(z)))

    l1 = jnp.sum(softplus(-pos_score) * m, axis=0, keepdims=True)    # labels=1
    l2 = jnp.sum(softplus(neg_score) * m, axis=0, keepdims=True)     # labels=0
    cnt = jnp.sum(m, axis=0, keepdims=True)
    # TODO(synk): kept as a (1,1) VMEM output; an SMEM scalar output would need
    # a vector->scalar extract, avoided here for lowering robustness.
    o_ref[...] = (l1 + l2) / cnt      # mean over masked indices, summed


_VMEM = pl.BlockSpec(memory_space=pltpu.MemorySpace.VMEM)


# -----------------------------------------------------------------------------
# Full forward (ID tower + sasrec benchmark): a single pallas_call.  The JAX
# wrapper only performs metadata-only (row-major compatible) reshapes.
# -----------------------------------------------------------------------------
@jax.jit
def model_forward(sample_items_id, log_mask, params):
    ids = sample_items_id.reshape(N_IDS, 1).astype(jnp.int32)   # (36, 1)
    mask_k = log_mask.reshape(1, BL)                            # key-padding mask
    mask_q = log_mask.reshape(BL, 1)                            # loss mask

    loss = pl.pallas_call(
        fused_kernel,
        out_shape=jax.ShapeDtypeStruct((1, 1), jnp.float32),
        in_specs=[_VMEM] * 14,
        out_specs=_VMEM,
    )(ids, mask_k, mask_q,
      params["id_emb"], params["perm"], params["attn_bias"], params["pos_emb"],
      params["w_qkvo"], params["b_qkvo"], params["w1"], params["b1"],
      params["w2"], params["b2"], params["ln"])
    return loss[0, 0]


def init_params(key):
    ks = jax.random.split(key, 8)

    def xavier(k, shape):
        std = math.sqrt(2.0 / (shape[0] + shape[1]))
        return jax.random.normal(k, shape, jnp.float32) * std

    # nn.Embedding(item_num+1, D, padding_idx=0): the reference then applies
    # xavier_normal_ to the FULL weight, so the padding row is NOT zero.
    id_emb = xavier(ks[0], (VOCAB, D))

    pos_emb = jnp.tile(xavier(ks[1], (L, D)), (B, 1))             # (BL, D)
    w_qkvo = jnp.stack([xavier(ks[2], (D, D)), xavier(ks[3], (D, D)),
                        xavier(ks[4], (D, D)), xavier(ks[5], (D, D))])  # (4,D,D)
    b_qkvo = jnp.zeros((4, D), jnp.float32)
    w1 = xavier(ks[6], (D, H))
    b1 = jnp.zeros((1, H), jnp.float32)
    w2 = xavier(ks[7], (H, D))
    b2 = jnp.zeros((1, D), jnp.float32)
    ln = jnp.concatenate([jnp.ones((3, D), jnp.float32),
                          jnp.zeros((3, D), jnp.float32)], axis=0)  # [g0..g2,b0..b2]

    # --- host-side (numpy) constants, passed as tiny inputs --------------------
    # Row-selection matrix: output rows [x | target_pos | target_neg] -> flat id.
    r = np.arange(3 * BL)
    g = r // BL                  # 0: x, 1: target_pos, 2: target_neg
    rr = r % BL
    b = rr // L
    s = rr % L
    off = np.where(g == 0, 0, np.where(g == 1, 2, 1))
    flat = b * (SEQ * 2) + s * 2 + off          # index into (B, SEQ, 2) ids
    perm = np.zeros((3 * BL, N_IDS), np.float32)
    perm[r, flat] = 1.0

    # Static attention bias: causal + per-user block-diagonal (0 / -1e9).
    row = np.arange(BL)[:, None]
    col = np.arange(BL)[None, :]
    static_ok = (col <= row) & ((row // L) == (col // L))
    attn_bias = np.where(static_ok, 0.0, NEG_INF).astype(np.float32)

    return {"id_emb": id_emb, "perm": jnp.asarray(perm),
            "attn_bias": jnp.asarray(attn_bias), "pos_emb": pos_emb,
            "w_qkvo": w_qkvo, "b_qkvo": b_qkvo, "w1": w1, "b1": b1,
            "w2": w2, "b2": b2, "ln": ln}


if __name__ == "__main__":
    key = jax.random.PRNGKey(0)
    k_param, k_ids = jax.random.split(key)

    params = init_params(k_param)
    sample_items_id = jax.random.randint(
        k_ids, (N_IDS,), minval=1, maxval=VOCAB, dtype=jnp.int32)
    log_mask = jnp.array(
        [[1, 1, 1, 1, 1, 0, 0, 0],
         [1, 1, 1, 1, 1, 1, 1, 1]], dtype=jnp.float32)            # (B, L)

    loss = model_forward(sample_items_id, log_mask, params)
    jax.block_until_ready(loss)
    assert jnp.isfinite(loss)
    print("KERNEL_OK")
</pallas_src>

<mosaic_0001>
module attributes {stable_mosaic.version = 11 : i64} {
  func.func @fused_kernel(%arg0: memref<36x1xi32, #tpu.memory_space<vmem>>, %arg1: memref<1x16xf32, #tpu.memory_space<vmem>>, %arg2: memref<16x1xf32, #tpu.memory_space<vmem>>, %arg3: memref<51x32xf32, #tpu.memory_space<vmem>>, %arg4: memref<48x36xf32, #tpu.memory_space<vmem>>, %arg5: memref<16x16xf32, #tpu.memory_space<vmem>>, %arg6: memref<16x32xf32, #tpu.memory_space<vmem>>, %arg7: memref<4x32x32xf32, #tpu.memory_space<vmem>>, %arg8: memref<4x32xf32, #tpu.memory_space<vmem>>, %arg9: memref<32x64xf32, #tpu.memory_space<vmem>>, %arg10: memref<1x64xf32, #tpu.memory_space<vmem>>, %arg11: memref<64x32xf32, #tpu.memory_space<vmem>>, %arg12: memref<1x32xf32, #tpu.memory_space<vmem>>, %arg13: memref<6x32xf32, #tpu.memory_space<vmem>>, %arg14: memref<1x1xf32, #tpu.memory_space<vmem>>) attributes {dimension_semantics = [], scalar_prefetch = 0 : i64, scratch_operands = 0 : i64, tpu.core_type = #tpu.core_type<tc>} {
    %c0 = arith.constant 0 : index
    %c0_0 = arith.constant 0 : index
    %0 = vector.load %arg0[%c0, %c0_0] : memref<36x1xi32, #tpu.memory_space<vmem>>, vector<36x1xi32>
    %1 = tpu.iota {dimensions = array<i32: 1>} : vector<36x51xi32>
    %2 = vector.broadcast %0 : vector<36x1xi32> to vector<36x51xi32>
    %3 = arith.cmpi eq, %2, %1 : vector<36x51xi32>
    %4 = arith.extui %3 : vector<36x51xi1> to vector<36x51xi32>
    %5 = arith.sitofp %4 : vector<36x51xi32> to vector<36x51xf32>
    %c0_1 = arith.constant 0 : index
    %c0_2 = arith.constant 0 : index
    %6 = vector.load %arg3[%c0_1, %c0_2] : memref<51x32xf32, #tpu.memory_space<vmem>>, vector<51x32xf32>
    %cst = arith.constant dense<0.000000e+00> : vector<36x32xf32>
    %7 = tpu.matmul %5, %6, %cst {dimension_numbers = #tpu.dot_dimension_numbers<[1], [0], [0], [1], [0, 0, 1, 1], [], []>} : vector<36x51xf32>, vector<51x32xf32>, vector<36x32xf32> -> vector<36x32xf32>
    %c0_3 = arith.constant 0 : index
    %c0_4 = arith.constant 0 : index
    %8 = vector.load %arg4[%c0_3, %c0_4] : memref<48x36xf32, #tpu.memory_space<vmem>>, vector<48x36xf32>
    %cst_5 = arith.constant dense<0.000000e+00> : vector<48x32xf32>
    %9 = tpu.matmul %8, %7, %cst_5 {dimension_numbers = #tpu.dot_dimension_numbers<[1], [0], [0], [1], [0, 0, 1, 1], [], []>} : vector<48x36xf32>, vector<36x32xf32>, vector<48x32xf32> -> vector<48x32xf32>
    %10 = vector.extract_strided_slice %9 {offsets = [0, 0], sizes = [16, 32], strides = [1, 1]} : vector<48x32xf32> to vector<16x32xf32>
    %11 = vector.extract_strided_slice %9 {offsets = [16, 0], sizes = [16, 32], strides = [1, 1]} : vector<48x32xf32> to vector<16x32xf32>
    %12 = vector.extract_strided_slice %9 {offsets = [32, 0], sizes = [16, 32], strides = [1, 1]} : vector<48x32xf32> to vector<16x32xf32>
    %c0_6 = arith.constant 0 : index
    %c0_7 = arith.constant 0 : index
    %13 = vector.load %arg6[%c0_6, %c0_7] : memref<16x32xf32, #tpu.memory_space<vmem>>, vector<16x32xf32>
    %14 = arith.addf %10, %13 : vector<16x32xf32>
    %c0_8 = arith.constant 0 : index
    %c0_9 = arith.constant 0 : index
    %15 = vector.load %arg13[%c0_8, %c0_9] : memref<6x32xf32, #tpu.memory_space<vmem>>, vector<1x32xf32>
    %c3 = arith.constant 3 : index
    %c0_10 = arith.constant 0 : index
    %16 = vector.load %arg13[%c3, %c0_10] : memref<6x32xf32, #tpu.memory_space<vmem>>, vector<1x32xf32>
    %cst_11 = arith.constant dense<0.000000e+00> : vector<16xf32>
    %17 = vector.multi_reduction <add>, %14, %cst_11 [1] : vector<16x32xf32> to vector<16xf32>
    %18 = vector.shape_cast %17 : vector<16xf32> to vector<16x1xf32>
    %cst_12 = arith.constant 3.200000e+01 : f32
    %19 = vector.broadcast %cst_12 : f32 to vector<16x1xf32>
    %20 = arith.divf %18, %19 : vector<16x1xf32>
    %21 = vector.broadcast %20 : vector<16x1xf32> to vector<16x32xf32>
    %22 = arith.subf %14, %21 : vector<16x32xf32>
    %23 = arith.mulf %22, %22 : vector<16x32xf32>
    %cst_13 = arith.constant dense<0.000000e+00> : vector<16xf32>
    %24 = vector.multi_reduction <add>, %23, %cst_13 [1] : vector<16x32xf32> to vector<16xf32>
    %25 = vector.shape_cast %24 : vector<16xf32> to vector<16x1xf32>
    %cst_14 = arith.constant 3.200000e+01 : f32
    %26 = vector.broadcast %cst_14 : f32 to vector<16x1xf32>
    %27 = arith.divf %25, %26 : vector<16x1xf32>
    %28 = vector.broadcast %20 : vector<16x1xf32> to vector<16x32xf32>
    %29 = arith.subf %14, %28 : vector<16x32xf32>
    %cst_15 = arith.constant 9.99999996E-13 : f32
    %30 = vector.broadcast %cst_15 : f32 to vector<16x1xf32>
    %31 = arith.addf %27, %30 : vector<16x1xf32>
    %32 = math.rsqrt %31 : vector<16x1xf32>
    %33 = vector.broadcast %32 : vector<16x1xf32> to vector<16x32xf32>
    %34 = arith.mulf %29, %33 : vector<16x32xf32>
    %35 = vector.broadcast %15 : vector<1x32xf32> to vector<16x32xf32>
    %36 = arith.mulf %34, %35 : vector<16x32xf32>
    %37 = vector.broadcast %16 : vector<1x32xf32> to vector<16x32xf32>
    %38 = arith.addf %36, %37 : vector<16x32xf32>
    %c0_16 = arith.constant 0 : index
    %c0_17 = arith.constant 0 : index
    %c0_18 = arith.constant 0 : index
    %39 = vector.load %arg7[%c0_16, %c0_17, %c0_18] : memref<4x32x32xf32, #tpu.memory_space<vmem>>, vector<1x32x32xf32>
    %40 = vector.shape_cast %39 : vector<1x32x32xf32> to vector<32x32xf32>
    %cst_19 = arith.constant dense<0.000000e+00> : vector<16x32xf32>
    %41 = tpu.matmul %38, %40, %cst_19 {dimension_numbers = #tpu.dot_dimension_numbers<[1], [0], [0], [1], [0, 0, 1, 1], [], []>} : vector<16x32xf32>, vector<32x32xf32>, vector<16x32xf32> -> vector<16x32xf32>
    %c0_20 = arith.constant 0 : index
    %c0_21 = arith.constant 0 : index
    %42 = vector.load %arg8[%c0_20, %c0_21] : memref<4x32xf32, #tpu.memory_space<vmem>>, vector<1x32xf32>
    %43 = vector.broadcast %42 : vector<1x32xf32> to vector<16x32xf32>
    %44 = arith.addf %41, %43 : vector<16x32xf32>
    %c1 = arith.constant 1 : index
    %c0_22 = arith.constant 0 : index
    %c0_23 = arith.constant 0 : index
    %45 = vector.load %arg7[%c1, %c0_22, %c0_23] : memref<4x32x32xf32, #tpu.memory_space<vmem>>, vector<1x32x32xf32>
    %46 = vector.shape_cast %45 : vector<1x32x32xf32> to vector<32x32xf32>
    %cst_24 = arith.constant dense<0.000000e+00> : vector<16x32xf32>
    %47 = tpu.matmul %38, %46, %cst_24 {dimension_numbers = #tpu.dot_dimension_numbers<[1], [0], [0], [1], [0, 0, 1, 1], [], []>} : vector<16x32xf32>, vector<32x32xf32>, vector<16x32xf32> -> vector<16x32xf32>
    %c1_25 = arith.constant 1 : index
    %c0_26 = arith.constant 0 : index
    %48 = vector.load %arg8[%c1_25, %c0_26] : memref<4x32xf32, #tpu.memory_space<vmem>>, vector<1x32xf32>
    %49 = vector.broadcast %48 : vector<1x32xf32> to vector<16x32xf32>
    %50 = arith.addf %47, %49 : vector<16x32xf32>
    %c2 = arith.constant 2 : index
    %c0_27 = arith.constant 0 : index
    %c0_28 = arith.constant 0 : index
    %51 = vector.load %arg7[%c2, %c0_27, %c0_28] : memref<4x32x32xf32, #tpu.memory_space<vmem>>, vector<1x32x32xf32>
    %52 = vector.shape_cast %51 : vector<1x32x32xf32> to vector<32x32xf32>
    %cst_29 = arith.constant dense<0.000000e+00> : vector<16x32xf32>
    %53 = tpu.matmul %38, %52, %cst_29 {dimension_numbers = #tpu.dot_dimension_numbers<[1], [0], [0], [1], [0, 0, 1, 1], [], []>} : vector<16x32xf32>, vector<32x32xf32>, vector<16x32xf32> -> vector<16x32xf32>
    %c2_30 = arith.constant 2 : index
    %c0_31 = arith.constant 0 : index
    %54 = vector.load %arg8[%c2_30, %c0_31] : memref<4x32xf32, #tpu.memory_space<vmem>>, vector<1x32xf32>
    %55 = vector.broadcast %54 : vector<1x32xf32> to vector<16x32xf32>
    %56 = arith.addf %53, %55 : vector<16x32xf32>
    %cst_32 = arith.constant dense<0.000000e+00> : vector<16x16xf32>
    %57 = tpu.matmul %44, %50, %cst_32 {dimension_numbers = #tpu.dot_dimension_numbers<[1], [1], [0], [0], [0, 0, 1, 0], [], []>} : vector<16x32xf32>, vector<16x32xf32>, vector<16x16xf32> -> vector<16x16xf32>
    %cst_33 = arith.constant 0.176776692 : f32
    %58 = vector.broadcast %cst_33 : f32 to vector<16x16xf32>
    %59 = arith.mulf %57, %58 : vector<16x16xf32>
    %c0_34 = arith.constant 0 : index
    %c0_35 = arith.constant 0 : index
    %60 = vector.load %arg5[%c0_34, %c0_35] : memref<16x16xf32, #tpu.memory_space<vmem>>, vector<16x16xf32>
    %61 = arith.addf %59, %60 : vector<16x16xf32>
    %c0_36 = arith.constant 0 : index
    %c0_37 = arith.constant 0 : index
    %62 = vector.load %arg1[%c0_36, %c0_37] : memref<1x16xf32, #tpu.memory_space<vmem>>, vector<1x16xf32>
    %cst_38 = arith.constant 0.000000e+00 : f32
    %63 = vector.broadcast %cst_38 : f32 to vector<1x16xf32>
    %64 = arith.cmpf one, %62, %63 : vector<1x16xf32>
    %cst_39 = arith.constant 0.000000e+00 : f32
    %cst_40 = arith.constant -1.000000e+09 : f32
    %65 = vector.broadcast %cst_39 : f32 to vector<1x16xf32>
    %66 = vector.broadcast %cst_40 : f32 to vector<1x16xf32>
    %67 = arith.select %64, %65, %66 : vector<1x16xi1>, vector<1x16xf32>
    %68 = vector.broadcast %67 : vector<1x16xf32> to vector<16x16xf32>
    %69 = arith.addf %61, %68 : vector<16x16xf32>
    %cst_41 = arith.constant dense<0xFF800000> : vector<16xf32>
    %70 = vector.multi_reduction <maximumf>, %69, %cst_41 [1] : vector<16x16xf32> to vector<16xf32>
    %71 = vector.shape_cast %70 : vector<16xf32> to vector<16x1xf32>
    %72 = vector.broadcast %71 : vector<16x1xf32> to vector<16x16xf32>
    %73 = arith.subf %69, %72 : vector<16x16xf32>
    %74 = math.exp %73 : vector<16x16xf32>
    %cst_42 = arith.constant dense<0.000000e+00> : vector<16xf32>
    %75 = vector.multi_reduction <add>, %74, %cst_42 [1] : vector<16x16xf32> to vector<16xf32>
    %76 = vector.shape_cast %75 : vector<16xf32> to vector<16x1xf32>
    %77 = tpu.reciprocal %76 {approx = true} : vector<16x1xf32> -> vector<16x1xf32>
    %78 = vector.broadcast %77 : vector<16x1xf32> to vector<16x16xf32>
    %79 = arith.mulf %74, %78 : vector<16x16xf32>
    %cst_43 = arith.constant dense<0.000000e+00> : vector<16x32xf32>
    %80 = tpu.matmul %79, %56, %cst_43 {dimension_numbers = #tpu.dot_dimension_numbers<[1], [0], [0], [1], [0, 0, 1, 1], [], []>} : vector<16x16xf32>, vector<16x32xf32>, vector<16x32xf32> -> vector<16x32xf32>
    %c3_44 = arith.constant 3 : index
    %c0_45 = arith.constant 0 : index
    %c0_46 = arith.constant 0 : index
    %81 = vector.load %arg7[%c3_44, %c0_45, %c0_46] : memref<4x32x32xf32, #tpu.memory_space<vmem>>, vector<1x32x32xf32>
    %82 = vector.shape_cast %81 : vector<1x32x32xf32> to vector<32x32xf32>
    %cst_47 = arith.constant dense<0.000000e+00> : vector<16x32xf32>
    %83 = tpu.matmul %80, %82, %cst_47 {dimension_numbers = #tpu.dot_dimension_numbers<[1], [0], [0], [1], [0, 0, 1, 1], [], []>} : vector<16x32xf32>, vector<32x32xf32>, vector<16x32xf32> -> vector<16x32xf32>
    %c3_48 = arith.constant 3 : index
    %c0_49 = arith.constant 0 : index
    %84 = vector.load %arg8[%c3_48, %c0_49] : memref<4x32xf32, #tpu.memory_space<vmem>>, vector<1x32xf32>
    %85 = vector.broadcast %84 : vector<1x32xf32> to vector<16x32xf32>
    %86 = arith.addf %83, %85 : vector<16x32xf32>
    %87 = arith.addf %38, %86 : vector<16x32xf32>
    %c1_50 = arith.constant 1 : index
    %c0_51 = arith.constant 0 : index
    %88 = vector.load %arg13[%c1_50, %c0_51] : memref<6x32xf32, #tpu.memory_space<vmem>>, vector<1x32xf32>
    %c4 = arith.constant 4 : index
    %c0_52 = arith.constant 0 : index
    %89 = vector.load %arg13[%c4, %c0_52] : memref<6x32xf32, #tpu.memory_space<vmem>>, vector<1x32xf32>
    %cst_53 = arith.constant dense<0.000000e+00> : vector<16xf32>
    %90 = vector.multi_reduction <add>, %87, %cst_53 [1] : vector<16x32xf32> to vector<16xf32>
    %91 = vector.shape_cast %90 : vector<16xf32> to vector<16x1xf32>
    %cst_54 = arith.constant 3.200000e+01 : f32
    %92 = vector.broadcast %cst_54 : f32 to vector<16x1xf32>
    %93 = arith.divf %91, %92 : vector<16x1xf32>
    %94 = vector.broadcast %93 : vector<16x1xf32> to vector<16x32xf32>
    %95 = arith.subf %87, %94 : vector<16x32xf32>
    %96 = arith.mulf %95, %95 : vector<16x32xf32>
    %cst_55 = arith.constant dense<0.000000e+00> : vector<16xf32>
    %97 = vector.multi_reduction <add>, %96, %cst_55 [1] : vector<16x32xf32> to vector<16xf32>
    %98 = vector.shape_cast %97 : vector<16xf32> to vector<16x1xf32>
    %cst_56 = arith.constant 3.200000e+01 : f32
    %99 = vector.broadcast %cst_56 : f32 to vector<16x1xf32>
    %100 = arith.divf %98, %99 : vector<16x1xf32>
    %101 = vector.broadcast %93 : vector<16x1xf32> to vector<16x32xf32>
    %102 = arith.subf %87, %101 : vector<16x32xf32>
    %cst_57 = arith.constant 9.99999996E-13 : f32
    %103 = vector.broadcast %cst_57 : f32 to vector<16x1xf32>
    %104 = arith.addf %100, %103 : vector<16x1xf32>
    %105 = math.rsqrt %104 : vector<16x1xf32>
    %106 = vector.broadcast %105 : vector<16x1xf32> to vector<16x32xf32>
    %107 = arith.mulf %102, %106 : vector<16x32xf32>
    %108 = vector.broadcast %88 : vector<1x32xf32> to vector<16x32xf32>
    %109 = arith.mulf %107, %108 : vector<16x32xf32>
    %110 = vector.broadcast %89 : vector<1x32xf32> to vector<16x32xf32>
    %111 = arith.addf %109, %110 : vector<16x32xf32>
    %c0_58 = arith.constant 0 : index
    %c0_59 = arith.constant 0 : index
    %112 = vector.load %arg9[%c0_58, %c0_59] : memref<32x64xf32, #tpu.memory_space<vmem>>, vector<32x64xf32>
    %cst_60 = arith.constant dense<0.000000e+00> : vector<16x64xf32>
    %113 = tpu.matmul %111, %112, %cst_60 {dimension_numbers = #tpu.dot_dimension_numbers<[1], [0], [0], [1], [0, 0, 1, 1], [], []>} : vector<16x32xf32>, vector<32x64xf32>, vector<16x64xf32> -> vector<16x64xf32>
    %c0_61 = arith.constant 0 : index
    %c0_62 = arith.constant 0 : index
    %114 = vector.load %arg10[%c0_61, %c0_62] : memref<1x64xf32, #tpu.memory_space<vmem>>, vector<1x64xf32>
    %115 = vector.broadcast %114 : vector<1x64xf32> to vector<16x64xf32>
    %116 = arith.addf %113, %115 : vector<16x64xf32>
    %117 = arith.mulf %116, %116 : vector<16x64xf32>
    %118 = arith.mulf %116, %117 : vector<16x64xf32>
    %cst_63 = arith.constant 4.471500e-02 : f32
    %119 = vector.broadcast %cst_63 : f32 to vector<16x64xf32>
    %120 = arith.mulf %119, %118 : vector<16x64xf32>
    %121 = arith.addf %116, %120 : vector<16x64xf32>
    %cst_64 = arith.constant 0.797884583 : f32
    %122 = vector.broadcast %cst_64 : f32 to vector<16x64xf32>
    %123 = arith.mulf %122, %121 : vector<16x64xf32>
    %124 = math.tanh %123 : vector<16x64xf32>
    %cst_65 = arith.constant 1.000000e+00 : f32
    %125 = vector.broadcast %cst_65 : f32 to vector<16x64xf32>
    %126 = arith.addf %125, %124 : vector<16x64xf32>
    %cst_66 = arith.constant 5.000000e-01 : f32
    %127 = vector.broadcast %cst_66 : f32 to vector<16x64xf32>
    %128 = arith.mulf %127, %126 : vector<16x64xf32>
    %129 = arith.mulf %116, %128 : vector<16x64xf32>
    %c0_67 = arith.constant 0 : index
    %c0_68 = arith.constant 0 : index
    %130 = vector.load %arg11[%c0_67, %c0_68] : memref<64x32xf32, #tpu.memory_space<vmem>>, vector<64x32xf32>
    %cst_69 = arith.constant dense<0.000000e+00> : vector<16x32xf32>
    %131 = tpu.matmul %129, %130, %cst_69 {dimension_numbers = #tpu.dot_dimension_numbers<[1], [0], [0], [1], [0, 0, 1, 1], [], []>} : vector<16x64xf32>, vector<64x32xf32>, vector<16x32xf32> -> vector<16x32xf32>
    %c0_70 = arith.constant 0 : index
    %c0_71 = arith.constant 0 : index
    %132 = vector.load %arg12[%c0_70, %c0_71] : memref<1x32xf32, #tpu.memory_space<vmem>>, vector<1x32xf32>
    %133 = vector.broadcast %132 : vector<1x32xf32> to vector<16x32xf32>
    %134 = arith.addf %131, %133 : vector<16x32xf32>
    %135 = arith.addf %111, %134 : vector<16x32xf32>
    %c2_72 = arith.constant 2 : index
    %c0_73 = arith.constant 0 : index
    %136 = vector.load %arg13[%c2_72, %c0_73] : memref<6x32xf32, #tpu.memory_space<vmem>>, vector<1x32xf32>
    %c5 = arith.constant 5 : index
    %c0_74 = arith.constant 0 : index
    %137 = vector.load %arg13[%c5, %c0_74] : memref<6x32xf32, #tpu.memory_space<vmem>>, vector<1x32xf32>
    %cst_75 = arith.constant dense<0.000000e+00> : vector<16xf32>
    %138 = vector.multi_reduction <add>, %135, %cst_75 [1] : vector<16x32xf32> to vector<16xf32>
    %139 = vector.shape_cast %138 : vector<16xf32> to vector<16x1xf32>
    %cst_76 = arith.constant 3.200000e+01 : f32
    %140 = vector.broadcast %cst_76 : f32 to vector<16x1xf32>
    %141 = arith.divf %139, %140 : vector<16x1xf32>
    %142 = vector.broadcast %141 : vector<16x1xf32> to vector<16x32xf32>
    %143 = arith.subf %135, %142 : vector<16x32xf32>
    %144 = arith.mulf %143, %143 : vector<16x32xf32>
    %cst_77 = arith.constant dense<0.000000e+00> : vector<16xf32>
    %145 = vector.multi_reduction <add>, %144, %cst_77 [1] : vector<16x32xf32> to vector<16xf32>
    %146 = vector.shape_cast %145 : vector<16xf32> to vector<16x1xf32>
    %cst_78 = arith.constant 3.200000e+01 : f32
    %147 = vector.broadcast %cst_78 : f32 to vector<16x1xf32>
    %148 = arith.divf %146, %147 : vector<16x1xf32>
    %149 = vector.broadcast %141 : vector<16x1xf32> to vector<16x32xf32>
    %150 = arith.subf %135, %149 : vector<16x32xf32>
    %cst_79 = arith.constant 9.99999996E-13 : f32
    %151 = vector.broadcast %cst_79 : f32 to vector<16x1xf32>
    %152 = arith.addf %148, %151 : vector<16x1xf32>
    %153 = math.rsqrt %152 : vector<16x1xf32>
    %154 = vector.broadcast %153 : vector<16x1xf32> to vector<16x32xf32>
    %155 = arith.mulf %150, %154 : vector<16x32xf32>
    %156 = vector.broadcast %136 : vector<1x32xf32> to vector<16x32xf32>
    %157 = arith.mulf %155, %156 : vector<16x32xf32>
    %158 = vector.broadcast %137 : vector<1x32xf32> to vector<16x32xf32>
    %159 = arith.addf %157, %158 : vector<16x32xf32>
    %160 = arith.mulf %159, %11 : vector<16x32xf32>
    %cst_80 = arith.constant dense<0.000000e+00> : vector<16xf32>
    %161 = vector.multi_reduction <add>, %160, %cst_80 [1] : vector<16x32xf32> to vector<16xf32>
    %162 = vector.shape_cast %161 : vector<16xf32> to vector<16x1xf32>
    %163 = arith.mulf %159, %12 : vector<16x32xf32>
    %cst_81 = arith.constant dense<0.000000e+00> : vector<16xf32>
    %164 = vector.multi_reduction <add>, %163, %cst_81 [1] : vector<16x32xf32> to vector<16xf32>
    %165 = vector.shape_cast %164 : vector<16xf32> to vector<16x1xf32>
    %c0_82 = arith.constant 0 : index
    %c0_83 = arith.constant 0 : index
    %166 = vector.load %arg2[%c0_82, %c0_83] : memref<16x1xf32, #tpu.memory_space<vmem>>, vector<16x1xf32>
    %cst_84 = arith.constant 0.000000e+00 : f32
    %167 = vector.broadcast %cst_84 : f32 to vector<16x1xf32>
    %168 = arith.cmpf one, %166, %167 : vector<16x1xf32>
    %169 = arith.extui %168 : vector<16x1xi1> to vector<16x1xi32>
    %170 = arith.sitofp %169 : vector<16x1xi32> to vector<16x1xf32>
    %cst_85 = arith.constant 0.000000e+00 : f32
    %171 = vector.broadcast %cst_85 : f32 to vector<16x1xf32>
    %172 = arith.subf %171, %162 : vector<16x1xf32>
    %cst_86 = arith.constant 0.000000e+00 : f32
    %173 = vector.broadcast %cst_86 : f32 to vector<16x1xf32>
    %174 = arith.maximumf %172, %173 : vector<16x1xf32>
    %175 = math.absf %172 : vector<16x1xf32>
    %cst_87 = arith.constant 0.000000e+00 : f32
    %176 = vector.broadcast %cst_87 : f32 to vector<16x1xf32>
    %177 = arith.subf %176, %175 : vector<16x1xf32>
    %178 = math.exp %177 : vector<16x1xf32>
    %cst_88 = arith.constant 1.000000e+00 : f32
    %179 = vector.broadcast %cst_88 : f32 to vector<16x1xf32>
    %180 = arith.addf %179, %178 : vector<16x1xf32>
    %181 = math.log %180 : vector<16x1xf32>
    %182 = arith.addf %174, %181 : vector<16x1xf32>
    %183 = arith.mulf %182, %170 : vector<16x1xf32>
    %cst_89 = arith.constant dense<0.000000e+00> : vector<1xf32>
    %184 = vector.multi_reduction <add>, %183, %cst_89 [0] : vector<16x1xf32> to vector<1xf32>
    %185 = vector.shape_cast %184 : vector<1xf32> to vector<1x1xf32>
    %cst_90 = arith.constant 0.000000e+00 : f32
    %186 = vector.broadcast %cst_90 : f32 to vector<16x1xf32>
    %187 = arith.maximumf %165, %186 : vector<16x1xf32>
    %188 = math.absf %165 : vector<16x1xf32>
    %cst_91 = arith.constant 0.000000e+00 : f32
    %189 = vector.broadcast %cst_91 : f32 to vector<16x1xf32>
    %190 = arith.subf %189, %188 : vector<16x1xf32>
    %191 = math.exp %190 : vector<16x1xf32>
    %cst_92 = arith.constant 1.000000e+00 : f32
    %192 = vector.broadcast %cst_92 : f32 to vector<16x1xf32>
    %193 = arith.addf %192, %191 : vector<16x1xf32>
    %194 = math.log %193 : vector<16x1xf32>
    %195 = arith.addf %187, %194 : vector<16x1xf32>
    %196 = arith.mulf %195, %170 : vector<16x1xf32>
    %cst_93 = arith.constant dense<0.000000e+00> : vector<1xf32>
    %197 = vector.multi_reduction <add>, %196, %cst_93 [0] : vector<16x1xf32> to vector<1xf32>
    %198 = vector.shape_cast %197 : vector<1xf32> to vector<1x1xf32>
    %cst_94 = arith.constant dense<0.000000e+00> : vector<1xf32>
    %199 = vector.multi_reduction <add>, %170, %cst_94 [0] : vector<16x1xf32> to vector<1xf32>
    %200 = vector.shape_cast %199 : vector<1xf32> to vector<1x1xf32>
    %201 = arith.addf %185, %198 : vector<1x1xf32>
    %202 = arith.divf %201, %200 : vector<1x1xf32>
    %c0_95 = arith.constant 0 : index
    %c0_96 = arith.constant 0 : index
    %203 = vector.load %arg14[%c0_95, %c0_96] : memref<1x1xf32, #tpu.memory_space<vmem>>, vector<1x1xf32>
    tpu.vector_store %arg14[%c0_95, %c0_96], %202 {strides = array<i32>} : memref<1x1xf32, #tpu.memory_space<vmem>>, vector<1x1xf32>,
    return
  }
}

</mosaic_0001>

<llo_original>
// kernel: model_forward.1
$region0: #{model_forward.1}
  #allocation0 [shape = 'u32[]', space=smem, size = 0x4, offset = 0x4, fixed_abs, tag = 'smem constant byte address 0x4 - core index']
  #allocation1 [shape = 'u32[144,128]{1,0:T(1,128)}', space=vmem, size = 0x12000, scoped, tag = 'internal scratch']
  %s0 = inlined_call_operand.vmem [shape: s32[36,1], index: 0, kind: input, shape index: {}]
  %s1 = inlined_call_operand.vmem [shape: f32[1,16], index: 1, kind: input, shape index: {}]
  %s2 = inlined_call_operand.vmem [shape: f32[16,1], index: 2, kind: input, shape index: {}]
  %s3 = inlined_call_operand.vmem [shape: f32[51,32], index: 3, kind: input, shape index: {}]
  %s4 = inlined_call_operand.vmem [shape: f32[48,36], index: 4, kind: input, shape index: {}]
  %s5 = inlined_call_operand.vmem [shape: f32[16,16], index: 5, kind: input, shape index: {}]
  %s6 = inlined_call_operand.vmem [shape: f32[16,32], index: 6, kind: input, shape index: {}]
  %s7 = inlined_call_operand.vmem [shape: f32[4,32,32], index: 7, kind: input, shape index: {}]
  %s8 = inlined_call_operand.vmem [shape: f32[4,32], index: 8, kind: input, shape index: {}]
  %s9 = inlined_call_operand.vmem [shape: f32[32,64], index: 9, kind: input, shape index: {}]
  %s10 = inlined_call_operand.vmem [shape: f32[1,64], index: 10, kind: input, shape index: {}]
  %s11 = inlined_call_operand.vmem [shape: f32[64,32], index: 11, kind: input, shape index: {}]
  %s12 = inlined_call_operand.vmem [shape: f32[1,32], index: 12, kind: input, shape index: {}]
  %s13 = inlined_call_operand.vmem [shape: f32[6,32], index: 13, kind: input, shape index: {}]
  %s14 = inlined_call_operand.hbm [shape: f32[1,1], index: 14, kind: output, shape index: {}]
  %s15 = sld [smem:[#allocation0]]
  $region66: #{model_forward.1} parent=0
    _
  %s17 = ssub.s32 1, %s15
  %s18 = scalar_select 0, %s17, %s15
  $region1: #{model_forward.1} parent=0
    #allocation2 [shape = 'u8[512]{0}', space=vmem, size = 0x400, scoped, tag = 'output window, operand 0, single buffered']
    #allocation3 [shape = 's32[1]{0}', space=sflag, size = 0x4, scoped, tag = 'scoped memory for model_forward.1']
    %19 = vsyncpa [#allocation3], 0
    // Predicated region
    $region2: #{model_forward.1} parent=1 // pred_check
      _
    $region3: #{model_forward.1} parent=1 // pred_check_branch
      %21 = sbr.rel (0) target = $region5
    $region4: #{model_forward.1} parent=1 // pred_region
      _
    $region5: #{model_forward.1} parent=1 // pred_fallthru
      _
    // Predicated region
    $region6: #{model_forward.1} parent=1 // pred_check
      _
    $region7: #{model_forward.1} parent=1 // pred_check_branch
      %23 = sbr.rel (0) target = $region9
    $region8: #{model_forward.1} parent=1 // pred_region
      _
    $region9: #{model_forward.1} parent=1 // pred_fallthru
      _
    // Predicated region
    $region10: #{model_forward.1} parent=1 // pred_check
      _
    $region11: #{model_forward.1} parent=1 // pred_check_branch
      %25 = sbr.rel (0) target = $region13
    $region12: #{model_forward.1} parent=1 // pred_region
      _
    $region13: #{model_forward.1} parent=1 // pred_fallthru
      _
    // Predicated region
    $region14: #{model_forward.1} parent=1 // pred_check
      _
    $region15: #{model_forward.1} parent=1 // pred_check_branch
      %27 = sbr.rel (0) target = $region17
    $region16: #{model_forward.1} parent=1 // pred_region
      _
    $region17: #{model_forward.1} parent=1 // pred_fallthru
      _
    // Predicated region
    $region18: #{model_forward.1} parent=1 // pred_check
      _
    $region19: #{model_forward.1} parent=1 // pred_check_branch
      %29 = sbr.rel (0) target = $region21
    $region20: #{model_forward.1} parent=1 // pred_region
      _
    $region21: #{model_forward.1} parent=1 // pred_fallthru
      _
    // Predicated region
    $region22: #{model_forward.1} parent=1 // pred_check
      _
    $region23: #{model_forward.1} parent=1 // pred_check_branch
      %31 = sbr.rel (0) target = $region25
    $region24: #{model_forward.1} parent=1 // pred_region
      _
    $region25: #{model_forward.1} parent=1 // pred_fallthru
      _
    // Predicated region
    $region26: #{model_forward.1} parent=1 // pred_check
      _
    $region27: #{model_forward.1} parent=1 // pred_check_branch
      %33 = sbr.rel (0) target = $region29
    $region28: #{model_forward.1} parent=1 // pred_region
      _
    $region29: #{model_forward.1} parent=1 // pred_fallthru
      _
    // Predicated region
    $region30: #{model_forward.1} parent=1 // pred_check
      _
    $region31: #{model_forward.1} parent=1 // pred_check_branch
      %35 = sbr.rel (0) target = $region33
    $region32: #{model_forward.1} parent=1 // pred_region
      _
    $region33: #{model_forward.1} parent=1 // pred_fallthru
      _
    // Predicated region
    $region34: #{model_forward.1} parent=1 // pred_check
      _
    $region35: #{model_forward.1} parent=1 // pred_check_branch
      %37 = sbr.rel (0) target = $region37
    $region36: #{model_forward.1} parent=1 // pred_region
      _
    $region37: #{model_forward.1} parent=1 // pred_fallthru
      _
    // Predicated region
    $region38: #{model_forward.1} parent=1 // pred_check
      _
    $region39: #{model_forward.1} parent=1 // pred_check_branch
      %39 = sbr.rel (0) target = $region41
    $region40: #{model_forward.1} parent=1 // pred_region
      _
    $region41: #{model_forward.1} parent=1 // pred_fallthru
      _
    // Predicated region
    $region42: #{model_forward.1} parent=1 // pred_check
      _
    $region43: #{model_forward.1} parent=1 // pred_check_branch
      %41 = sbr.rel (0) target = $region45
    $region44: #{model_forward.1} parent=1 // pred_region
      _
    $region45: #{model_forward.1} parent=1 // pred_fallthru
      _
    // Predicated region
    $region46: #{model_forward.1} parent=1 // pred_check
      _
    $region47: #{model_forward.1} parent=1 // pred_check_branch
      %43 = sbr.rel (0) target = $region49
    $region48: #{model_forward.1} parent=1 // pred_region
      _
    $region49: #{model_forward.1} parent=1 // pred_fallthru
      _
    // Predicated region
    $region50: #{model_forward.1} parent=1 // pred_check
      _
    $region51: #{model_forward.1} parent=1 // pred_check_branch
      %45 = sbr.rel (0) target = $region53
    $region52: #{model_forward.1} parent=1 // pred_region
      _
    $region53: #{model_forward.1} parent=1 // pred_fallthru
      _
    // Predicated region
    $region54: #{model_forward.1} parent=1 // pred_check
      _
    $region55: #{model_forward.1} parent=1 // pred_check_branch
      %47 = sbr.rel (0) target = $region57
    $region56: #{model_forward.1} parent=1 // pred_region
      _
    $region57: #{model_forward.1} parent=1 // pred_fallthru
      _
    %v48 = vld [vmem:[%s0] sm:$0xff]
    %v49 = vld [vmem:[%s0 + $0x8] sm:$0xff]
    %v50 = vld [vmem:[%s0 + $0x10] sm:$0xff]
    %v51 = vld [vmem:[%s0 + $0x18] sm:$0xff]
    %v52 = vld [vmem:[%s0 + $0x20] sm:$0xf]
    %v53 = vlaneseq
    %v54 = vand.u32 %v53, 127
    %55 = vset.pattern.permute.xlu0 0
    %56 = vperm.xlu0 %55, %v48
    %v57 = vpop.permute.xlu0 %56
    %58 = vset.pattern.permute.xlu0 0
    %59 = vperm.xlu0 %58, %v49
    %v60 = vpop.permute.xlu0 %59
    %61 = vset.pattern.permute.xlu0 0
    %62 = vperm.xlu0 %61, %v50
    %v63 = vpop.permute.xlu0 %62
    %64 = vset.pattern.permute.xlu0 0
    %65 = vperm.xlu0 %64, %v51
    %v66 = vpop.permute.xlu0 %65
    %67 = vset.pattern.permute.xlu0 0
    %68 = vperm.xlu0 %67, %v52
    %v69 = vpop.permute.xlu0 %68
    %vm70 = vcmp.eq.s32.totalorder %v57, %v54
    %vm71 = vcmp.eq.s32.totalorder %v60, %v54
    %vm72 = vcmp.eq.s32.totalorder %v63, %v54
    %vm73 = vcmp.eq.s32.totalorder %v66, %v54
    %vm74 = vcmp.eq.s32.totalorder %v69, %v54
    %v75 = vsel %vm70, 1, 0
    %v76 = vsel %vm71, 1, 0
    %v77 = vsel %vm72, 1, 0
    %v78 = vsel %vm73, 1, 0
    %v79 = vsel %vm74, 1, 0
    %v80 = vcvt.s32.f32 %v75
    %v81 = vcvt.s32.f32 %v76
    %v82 = vcvt.s32.f32 %v77
    %v83 = vcvt.s32.f32 %v78
    %v84 = vcvt.s32.f32 %v79
    %v85 = vld [vmem:[%s3] sm:$0xff]
    %v86 = vld [vmem:[%s3 + $0x8] sm:$0xff]
    %v87 = vld [vmem:[%s3 + $0x10] sm:$0xff]
    %v88 = vld [vmem:[%s3 + $0x18] sm:$0xff]
    %v89 = vld [vmem:[%s3 + $0x20] sm:$0xff]
    %v90 = vld [vmem:[%s3 + $0x28] sm:$0xff]
    %v91 = vld [vmem:[%s3 + $0x30] sm:$0x7]
    %vm92 = vcmask 416768
    %v94 = vsel %vm92, %v80, 0
    %v97 = vsel %vm92, %v81, 0
    %v100 = vsel %vm92, %v82, 0
    %v103 = vsel %vm92, %v83, 0
    %v106 = vsel %vm92, %v84, 0
    %vm108 = vcmask 1042432
    %v110 = vsel %vm108, %v91, 0
    %112 = vmatprep.subr.mxu0 0.0
    %113 = vmatpush1.msra.mxu0 %v85
    %114 = vmatprep.subr.mxu0 0.0
    %115 = vmatpush1.msra.mxu0 %v86
    %116 = vmatprep.subr.mxu0 0.0
    %117 = vmatpush1.msra.mxu0 %v87
    %118 = vmatprep.subr.mxu0 0.0
    %119 = vmatpush1.msra.mxu0 %v88
    %120 = vmatprep.subr.mxu0 0.0
    %121 = vmatpush1.msra.mxu0 %v89
    %122 = vmatprep.subr.mxu0 0.0
    %123 = vmatpush1.msra.mxu0 %v90
    %124 = vmatprep.subr.mxu0 0.0
    %125 = vmatpush1.msra.mxu0 %v110
    %126 = vmatprep.subr.mxu0 0.0
    %127 = vmatpush1.msra.mxu0 0.0
    %128 = vmatprep.subr.mxu0 0.0
    %129 = vmatpush1.msra.mxu0 0.0
    %130 = vmatprep.subr.mxu0 0.0
    %131 = vmatpush1.msra.mxu0 0.0
    %132 = vmatprep.subr.mxu0 0.0
    %133 = vmatpush1.msra.mxu0 0.0
    %134 = vmatprep.subr.mxu0 0.0
    %135 = vmatpush1.msra.mxu0 0.0
    %136 = vmatprep.subr.mxu0 0.0
    %137 = vmatpush1.msra.mxu0 0.0
    %138 = vmatprep.subr.mxu0 0.0
    %139 = vmatpush1.msra.mxu0 0.0
    %140 = vmatprep.subr.mxu0 0.0
    %141 = vmatpush1.msra.mxu0 0.0
    %142 = vmatprep.subr.mxu0 0.0
    %143 = vmatpush1.msra.mxu0 0.0
    %144 = vmatprep.subr.mxu0 0.0
    %145 = vmatpush1.msra.mxu0 0.0
    %146 = vmatprep.subr.mxu0 0.0
    %147 = vmatpush1.msra.mxu0 0.0
    %148 = vmatprep.subr.mxu0 0.0
    %149 = vmatpush1.msra.mxu0 0.0
    %150 = vmatprep.subr.mxu0 0.0
    %151 = vmatpush1.msra.mxu0 0.0
    %152 = vmatprep.subr.mxu0 0.0
    %153 = vmatpush1.msra.mxu0 0.0
    %154 = vmatprep.subr.mxu0 0.0
    %155 = vmatpush1.msra.mxu0 0.0
    %156 = vmatprep.subr.mxu0 0.0
    %157 = vmatpush1.msra.mxu0 0.0
    %158 = vmatprep.subr.mxu0 0.0
    %159 = vmatpush1.msra.mxu0 0.0
    %160 = vmatprep.subr.mxu0 0.0
    %161 = vmatpush1.msra.mxu0 0.0
    %162 = vmatprep.subr.mxu0 0.0
    %163 = vmatpush1.msra.mxu0 0.0
    %164 = vmatprep.subr.mxu0 0.0
    %165 = vmatpush1.msra.mxu0 0.0
    %166 = vmatprep.subr.mxu0 0.0
    %167 = vmatpush1.msra.mxu0 0.0
    %168 = vmatprep.subr.mxu0 0.0
    %169 = vmatpush1.msra.mxu0 0.0
    %170 = vmatprep.subr.mxu0 0.0
    %171 = vmatpush1.msra.mxu0 0.0
    %172 = vmatprep.subr.mxu0 0.0
    %173 = vmatpush1.msra.mxu0 0.0
    %174 = vmatprep.subr.mxu0 0.0
    %175 = vmatpush1.msra.mxu0 0.0
    %176 = vmatprep.mubr.f32.mxu0 0.0
    %177 = vmatmul.mubr.f32.gmra.mrb[0].mxu0 %v94
    %v178 = vpop.f32.mrb[0].mxu0
    %v179 = vadd.f32 0.0, %v178
    %v180 = vpop.f32.mrb[0].mxu0
    %181 = vmatprep.mubr.f32.mxu0 0.0
    %182 = vmatmul.mubr.f32.gmra.mrb[0].mxu0 %v97
    %v183 = vpop.f32.mrb[0].mxu0
    %v184 = vadd.f32 0.0, %v183
    %v185 = vpop.f32.mrb[0].mxu0
    %186 = vmatprep.mubr.f32.mxu0 0.0
    %187 = vmatmul.mubr.f32.gmra.mrb[0].mxu0 %v100
    %v188 = vpop.f32.mrb[0].mxu0
    %v189 = vadd.f32 0.0, %v188
    %v190 = vpop.f32.mrb[0].mxu0
    %191 = vmatprep.mubr.f32.mxu0 0.0
    %192 = vmatmul.mubr.f32.gmra.mrb[0].mxu0 %v103
    %v193 = vpop.f32.mrb[0].mxu0
    %v194 = vadd.f32 0.0, %v193
    %v195 = vpop.f32.mrb[0].mxu0
    %196 = vmatprep.mubr.f32.mxu0 0.0
    %197 = vmatmul.mubr.f32.gmra.mrb[0].mxu0 %v106
    %v198 = vpop.f32.mrb[0].mxu0
    %v199 = vadd.f32 0.0, %v198
    %v200 = vpop.f32.mrb[0].mxu0
    %201 = vdwg.mxu0
    %v202 = vld [vmem:[%s4] sm:$0xff]
    %v203 = vld [vmem:[%s4 + $0x8] sm:$0xff]
    %v204 = vld [vmem:[%s4 + $0x10] sm:$0xff]
    %v205 = vld [vmem:[%s4 + $0x18] sm:$0xff]
    %v206 = vld [vmem:[%s4 + $0x20] sm:$0xff]
    %v207 = vld [vmem:[%s4 + $0x28] sm:$0xff]
    %vm208 = vcmask 293888
    %v210 = vsel %vm208, %v202, 0
    %v213 = vsel %vm208, %v203, 0
    %v216 = vsel %vm208, %v204, 0
    %v219 = vsel %vm208, %v205, 0
    %v222 = vsel %vm208, %v206, 0
    %v225 = vsel %vm208, %v207, 0
    %vm227 = vcmask 1043456
    %v229 = vsel %vm227, %v199, 0
    %231 = vmatprep.subr.mxu0 0.0
    %232 = vmatpush1.msra.mxu0 %v179
    %233 = vmatprep.subr.mxu0 0.0
    %234 = vmatpush1.msra.mxu0 %v184
    %235 = vmatprep.subr.mxu0 0.0
    %236 = vmatpush1.msra.mxu0 %v189
    %237 = vmatprep.subr.mxu0 0.0
    %238 = vmatpush1.msra.mxu0 %v194
    %239 = vmatprep.subr.mxu0 0.0
    %240 = vmatpush1.msra.mxu0 %v229
    %241 = vmatprep.subr.mxu0 0.0
    %242 = vmatpush1.msra.mxu0 0.0
    %243 = vmatprep.subr.mxu0 0.0
    %244 = vmatpush1.msra.mxu0 0.0
    %245 = vmatprep.subr.mxu0 0.0
    %246 = vmatpush1.msra.mxu0 0.0
    %247 = vmatprep.subr.mxu0 0.0
    %248 = vmatpush1.msra.mxu0 0.0
    %249 = vmatprep.subr.mxu0 0.0
    %250 = vmatpush1.msra.mxu0 0.0
    %251 = vmatprep.subr.mxu0 0.0
    %252 = vmatpush1.msra.mxu0 0.0
    %253 = vmatprep.subr.mxu0 0.0
    %254 = vmatpush1.msra.mxu0 0.0
    %255 = vmatprep.subr.mxu0 0.0
    %256 = vmatpush1.msra.mxu0 0.0
    %257 = vmatprep.subr.mxu0 0.0
    %258 = vmatpush1.msra.mxu0 0.0
    %259 = vmatprep.subr.mxu0 0.0
    %260 = vmatpush1.msra.mxu0 0.0
    %261 = vmatprep.subr.mxu0 0.0
    %262 = vmatpush1.msra.mxu0 0.0
    %263 = vmatprep.subr.mxu0 0.0
    %264 = vmatpush1.msra.mxu0 0.0
    %265 = vmatprep.subr.mxu0 0.0
    %266 = vmatpush1.msra.mxu0 0.0
    %267 = vmatprep.subr.mxu0 0.0
    %268 = vmatpush1.msra.mxu0 0.0
    %269 = vmatprep.subr.mxu0 0.0
    %270 = vmatpush1.msra.mxu0 0.0
    %271 = vmatprep.subr.mxu0 0.0
    %272 = vmatpush1.msra.mxu0 0.0
    %273 = vmatprep.subr.mxu0 0.0
    %274 = vmatpush1.msra.mxu0 0.0
    %275 = vmatprep.subr.mxu0 0.0
    %276 = vmatpush1.msra.mxu0 0.0
    %277 = vmatprep.subr.mxu0 0.0
    %278 = vmatpush1.msra.mxu0 0.0
    %279 = vmatprep.subr.mxu0 0.0
    %280 = vmatpush1.msra.mxu0 0.0
    %281 = vmatprep.subr.mxu0 0.0
    %282 = vmatpush1.msra.mxu0 0.0
    %283 = vmatprep.subr.mxu0 0.0
    %284 = vmatpush1.msra.mxu0 0.0
    %285 = vmatprep.subr.mxu0 0.0
    %286 = vmatpush1.msra.mxu0 0.0
    %287 = vmatprep.subr.mxu0 0.0
    %288 = vmatpush1.msra.mxu0 0.0
    %289 = vmatprep.subr.mxu0 0.0
    %290 = vmatpush1.msra.mxu0 0.0
    %291 = vmatprep.subr.mxu0 0.0
    %292 = vmatpush1.msra.mxu0 0.0
    %293 = vmatprep.subr.mxu0 0.0
    %294 = vmatpush1.msra.mxu0 0.0
    %295 = vmatprep.mubr.f32.mxu0 0.0
    %296 = vmatmul.mubr.f32.gmra.mrb[0].mxu0 %v210
    %v297 = vpop.f32.mrb[0].mxu0
    %v298 = vadd.f32 0.0, %v297
    %v299 = vpop.f32.mrb[0].mxu0
    %300 = vmatprep.mubr.f32.mxu0 0.0
    %301 = vmatmul.mubr.f32.gmra.mrb[0].mxu0 %v213
    %v302 = vpop.f32.mrb[0].mxu0
    %v303 = vadd.f32 0.0, %v302
    %v304 = vpop.f32.mrb[0].mxu0
    %305 = vmatprep.mubr.f32.mxu0 0.0
    %306 = vmatmul.mubr.f32.gmra.mrb[0].mxu0 %v216
    %v307 = vpop.f32.mrb[0].mxu0
    %v308 = vadd.f32 0.0, %v307
    %v309 = vpop.f32.mrb[0].mxu0
    %310 = vmatprep.mubr.f32.mxu0 0.0
    %311 = vmatmul.mubr.f32.gmra.mrb[0].mxu0 %v219
    %v312 = vpop.f32.mrb[0].mxu0
    %v313 = vadd.f32 0.0, %v312
    %v314 = vpop.f32.mrb[0].mxu0
    %315 = vmatprep.mubr.f32.mxu0 0.0
    %316 = vmatmul.mubr.f32.gmra.mrb[0].mxu0 %v222
    %v317 = vpop.f32.mrb[0].mxu0
    %v318 = vadd.f32 0.0, %v317
    %v319 = vpop.f32.mrb[0].mxu0
    %320 = vmatprep.mubr.f32.mxu0 0.0
    %321 = vmatmul.mubr.f32.gmra.mrb[0].mxu0 %v225
    %v322 = vpop.f32.mrb[0].mxu0
    %v323 = vadd.f32 0.0, %v322
    %v324 = vpop.f32.mrb[0].mxu0
    %325 = vdwg.mxu0
    %v326 = vld [vmem:[%s6] sm:$0xff]
    %v327 = vld [vmem:[%s6 + $0x8] sm:$0xff]
    %v328 = vadd.f32 %v298, %v326
    %v329 = vadd.f32 %v303, %v327
    %v330 = vld [vmem:[%s13] sm:$0x1]
    %v331 = vld [vmem:[%s13 + $0x3] sm:$0x1]
    %vm332 = vcmask 261120
    %v333 = vsel %vm332, %v328, 0.0
    %334 = vadd.xlane.f32.xlu0 %v333
    %v335 = vpop.xlane.xlu0 %334
    %v336 = vsel %vm332, %v329, 0.0
    %337 = vadd.xlane.f32.xlu0 %v336
    %v338 = vpop.xlane.xlu0 %337
    %v339 = vrcp.pop 32.0
    %v340 = vmul.f32 %v335, %v339
    %v341 = vmul.f32 %v338, %v339
    %v342 = vsub.f32 %v328, %v340
    %v343 = vsub.f32 %v329, %v341
    %v344 = vmul.f32 %v342, %v342
    %v345 = vmul.f32 %v343, %v343
    %v346 = vsel %vm332, %v344, 0.0
    %347 = vadd.xlane.f32.xlu0 %v346
    %v348 = vpop.xlane.xlu0 %347
    %v349 = vsel %vm332, %v345, 0.0
    %350 = vadd.xlane.f32.xlu0 %v349
    %v351 = vpop.xlane.xlu0 %350
    %v352 = vmul.f32 %v348, %v339
    %v353 = vmul.f32 %v351, %v339
    %v354 = vadd.f32 %v352, 1e-12
    %v355 = vadd.f32 %v353, 1e-12
    %v356 = vrsqrt.pop %v354
    %v357 = vrsqrt.pop %v355
    %v358 = vmul.f32 %v342, %v356
    %v359 = vmul.f32 %v343, %v357
    %v360 = vlaneseq
    %v361 = vshrl.u32 %v360, 7
    %v362 = vsub.s32 0, %v361
    %v363 = vrot.slane %v330, %v362
    %v364 = vmul.f32 %v358, %v363
    %v365 = vmul.f32 %v359, %v363
    %v366 = vlaneseq
    %v367 = vshrl.u32 %v366, 7
    %v368 = vsub.s32 0, %v367
    %v369 = vrot.slane %v331, %v368
    %v370 = vadd.f32 %v364, %v369
    %v371 = vadd.f32 %v365, %v369
    %v372 = vld [vmem:[%s7] sm:$0xff]
    %v373 = vld [vmem:[%s7 + $0x8] sm:$0xff]
    %v374 = vld [vmem:[%s7 + $0x10] sm:$0xff]
    %v375 = vld [vmem:[%s7 + $0x18] sm:$0xff]
    %v376 = vld [vmem:[%s8] sm:$0x1]
    %v377 = vlaneseq
    %v378 = vshrl.u32 %v377, 7
    %v379 = vsub.s32 0, %v378
    %v380 = vrot.slane %v376, %v379
    %v382 = vsel %vm332, %v370, 0
    %v385 = vsel %vm332, %v371, 0
    %387 = vmatprep.subr.mxu0 0.0
    %388 = vmatpush1.msra.mxu0 %v372
    %389 = vmatprep.subr.mxu0 0.0
    %390 = vmatpush1.msra.mxu0 %v373
    %391 = vmatprep.subr.mxu0 0.0
    %392 = vmatpush1.msra.mxu0 %v374
    %393 = vmatprep.subr.mxu0 0.0
    %394 = vmatpush1.msra.mxu0 %v375
    %395 = vmatprep.subr.mxu0 0.0
    %396 = vmatpush1.msra.mxu0 0.0
    %397 = vmatprep.subr.mxu0 0.0
    %398 = vmatpush1.msra.mxu0 0.0
    %399 = vmatprep.subr.mxu0 0.0
    %400 = vmatpush1.msra.mxu0 0.0
    %401 = vmatprep.subr.mxu0 0.0
    %402 = vmatpush1.msra.mxu0 0.0
    %403 = vmatprep.subr.mxu0 0.0
    %404 = vmatpush1.msra.mxu0 0.0
    %405 = vmatprep.subr.mxu0 0.0
    %406 = vmatpush1.msra.mxu0 0.0
    %407 = vmatprep.subr.mxu0 0.0
    %408 = vmatpush1.msra.mxu0 0.0
    %409 = vmatprep.subr.mxu0 0.0
    %410 = vmatpush1.msra.mxu0 0.0
    %411 = vmatprep.subr.mxu0 0.0
    %412 = vmatpush1.msra.mxu0 0.0
    %413 = vmatprep.subr.mxu0 0.0
    %414 = vmatpush1.msra.mxu0 0.0
    %415 = vmatprep.subr.mxu0 0.0
    %416 = vmatpush1.msra.mxu0 0.0
    %417 = vmatprep.subr.mxu0 0.0
    %418 = vmatpush1.msra.mxu0 0.0
    %419 = vmatprep.subr.mxu0 0.0
    %420 = vmatpush1.msra.mxu0 0.0
    %421 = vmatprep.subr.mxu0 0.0
    %422 = vmatpush1.msra.mxu0 0.0
    %423 = vmatprep.subr.mxu0 0.0
    %424 = vmatpush1.msra.mxu0 0.0
    %425 = vmatprep.subr.mxu0 0.0
    %426 = vmatpush1.msra.mxu0 0.0
    %427 = vmatprep.subr.mxu0 0.0
    %428 = vmatpush1.msra.mxu0 0.0
    %429 = vmatprep.subr.mxu0 0.0
    %430 = vmatpush1.msra.mxu0 0.0
    %431 = vmatprep.subr.mxu0 0.0
    %432 = vmatpush1.msra.mxu0 0.0
    %433 = vmatprep.subr.mxu0 0.0
    %434 = vmatpush1.msra.mxu0 0.0
    %435 = vmatprep.subr.mxu0 0.0
    %436 = vmatpush1.msra.mxu0 0.0
    %437 = vmatprep.subr.mxu0 0.0
    %438 = vmatpush1.msra.mxu0 0.0
    %439 = vmatprep.subr.mxu0 0.0
    %440 = vmatpush1.msra.mxu0 0.0
    %441 = vmatprep.subr.mxu0 0.0
    %442 = vmatpush1.msra.mxu0 0.0
    %443 = vmatprep.subr.mxu0 0.0
    %444 = vmatpush1.msra.mxu0 0.0
    %445 = vmatprep.subr.mxu0 0.0
    %446 = vmatpush1.msra.mxu0 0.0
    %447 = vmatprep.subr.mxu0 0.0
    %448 = vmatpush1.msra.mxu0 0.0
    %449 = vmatprep.subr.mxu0 0.0
    %450 = vmatpush1.msra.mxu0 0.0
    %451 = vmatprep.mubr.f32.mxu0 0.0
    %452 = vmatmul.mubr.f32.gmra.mrb[0].mxu0 %v382
    %v453 = vpop.f32.mrb[0].mxu0
    %v454 = vadd.f32 %v380, %v453
    %v455 = vpop.f32.mrb[0].mxu0
    %456 = vmatprep.mubr.f32.mxu0 0.0
    %457 = vmatmul.mubr.f32.gmra.mrb[0].mxu0 %v385
    %v458 = vpop.f32.mrb[0].mxu0
    %v459 = vadd.f32 %v380, %v458
    %v460 = vpop.f32.mrb[0].mxu0
    %461 = vdwg.mxu0
    %s462 = scalar_lea.vmem %s7, 32
    %v463 = vld [vmem:[%s462] sm:$0xff]
    %v464 = vld [vmem:[%s462 + $0x8] sm:$0xff]
    %v465 = vld [vmem:[%s462 + $0x10] sm:$0xff]
    %v466 = vld [vmem:[%s462 + $0x18] sm:$0xff]
    %v467 = vld [vmem:[%s8 + $0x1] sm:$0x1]
    %v468 = vlaneseq
    %v469 = vshrl.u32 %v468, 7
    %v470 = vsub.s32 0, %v469
    %v471 = vrot.slane %v467, %v470
    %472 = vmatprep.subr.mxu0 0.0
    %473 = vmatpush1.msra.mxu0 %v463
    %474 = vmatprep.subr.mxu0 0.0
    %475 = vmatpush1.msra.mxu0 %v464
    %476 = vmatprep.subr.mxu0 0.0
    %477 = vmatpush1.msra.mxu0 %v465
    %478 = vmatprep.subr.mxu0 0.0
    %479 = vmatpush1.msra.mxu0 %v466
    %480 = vmatprep.subr.mxu0 0.0
    %481 = vmatpush1.msra.mxu0 0.0
    %482 = vmatprep.subr.mxu0 0.0
    %483 = vmatpush1.msra.mxu0 0.0
    %484 = vmatprep.subr.mxu0 0.0
    %485 = vmatpush1.msra.mxu0 0.0
    %486 = vmatprep.subr.mxu0 0.0
    %487 = vmatpush1.msra.mxu0 0.0
    %488 = vmatprep.subr.mxu0 0.0
    %489 = vmatpush1.msra.mxu0 0.0
    %490 = vmatprep.subr.mxu0 0.0
    %491 = vmatpush1.msra.mxu0 0.0
    %492 = vmatprep.subr.mxu0 0.0
    %493 = vmatpush1.msra.mxu0 0.0
    %494 = vmatprep.subr.mxu0 0.0
    %495 = vmatpush1.msra.mxu0 0.0
    %496 = vmatprep.subr.mxu0 0.0
    %497 = vmatpush1.msra.mxu0 0.0
    %498 = vmatprep.subr.mxu0 0.0
    %499 = vmatpush1.msra.mxu0 0.0
    %500 = vmatprep.subr.mxu0 0.0
    %501 = vmatpush1.msra.mxu0 0.0
    %502 = vmatprep.subr.mxu0 0.0
    %503 = vmatpush1.msra.mxu0 0.0
    %504 = vmatprep.subr.mxu0 0.0
    %505 = vmatpush1.msra.mxu0 0.0
    %506 = vmatprep.subr.mxu0 0.0
    %507 = vmatpush1.msra.mxu0 0.0
    %508 = vmatprep.subr.mxu0 0.0
    %509 = vmatpush1.msra.mxu0 0.0
    %510 = vmatprep.subr.mxu0 0.0
    %511 = vmatpush1.msra.mxu0 0.0
    %512 = vmatprep.subr.mxu0 0.0
    %513 = vmatpush1.msra.mxu0 0.0
    %514 = vmatprep.subr.mxu0 0.0
    %515 = vmatpush1.msra.mxu0 0.0
    %516 = vmatprep.subr.mxu0 0.0
    %517 = vmatpush1.msra.mxu0 0.0
    %518 = vmatprep.subr.mxu0 0.0
    %519 = vmatpush1.msra.mxu0 0.0
    %520 = vmatprep.subr.mxu0 0.0
    %521 = vmatpush1.msra.mxu0 0.0
    %522 = vmatprep.subr.mxu0 0.0
    %523 = vmatpush1.msra.mxu0 0.0
    %524 = vmatprep.subr.mxu0 0.0
    %525 = vmatpush1.msra.mxu0 0.0
    %526 = vmatprep.subr.mxu0 0.0
    %527 = vmatpush1.msra.mxu0 0.0
    %528 = vmatprep.subr.mxu0 0.0
    %529 = vmatpush1.msra.mxu0 0.0
    %530 = vmatprep.subr.mxu0 0.0
    %531 = vmatpush1.msra.mxu0 0.0
    %532 = vmatprep.subr.mxu0 0.0
    %533 = vmatpush1.msra.mxu0 0.0
    %534 = vmatprep.subr.mxu0 0.0
    %535 = vmatpush1.msra.mxu0 0.0
    %536 = vmatprep.mubr.f32.mxu0 0.0
    %537 = vmatmul.mubr.f32.gmra.mrb[0].mxu0 %v382
    %v538 = vpop.f32.mrb[0].mxu0
    %v539 = vadd.f32 %v471, %v538
    %v540 = vpop.f32.mrb[0].mxu0
    %541 = vmatprep.mubr.f32.mxu0 0.0
    %542 = vmatmul.mubr.f32.gmra.mrb[0].mxu0 %v385
    %v543 = vpop.f32.mrb[0].mxu0
    %v544 = vadd.f32 %v471, %v543
    %v545 = vpop.f32.mrb[0].mxu0
    %546 = vdwg.mxu0
    %s547 = scalar_lea.vmem %s7, 64
    %v548 = vld [vmem:[%s547] sm:$0xff]
    %v549 = vld [vmem:[%s547 + $0x8] sm:$0xff]
    %v550 = vld [vmem:[%s547 + $0x10] sm:$0xff]
    %v551 = vld [vmem:[%s547 + $0x18] sm:$0xff]
    %v552 = vld [vmem:[%s8 + $0x2] sm:$0x1]
    %v553 = vlaneseq
    %v554 = vshrl.u32 %v553, 7
    %v555 = vsub.s32 0, %v554
    %v556 = vrot.slane %v552, %v555
    %557 = vmatprep.subr.mxu0 0.0
    %558 = vmatpush1.msra.mxu0 %v548
    %559 = vmatprep.subr.mxu0 0.0
    %560 = vmatpush1.msra.mxu0 %v549
    %561 = vmatprep.subr.mxu0 0.0
    %562 = vmatpush1.msra.mxu0 %v550
    %563 = vmatprep.subr.mxu0 0.0
    %564 = vmatpush1.msra.mxu0 %v551
    %565 = vmatprep.subr.mxu0 0.0
    %566 = vmatpush1.msra.mxu0 0.0
    %567 = vmatprep.subr.mxu0 0.0
    %568 = vmatpush1.msra.mxu0 0.0
    %569 = vmatprep.subr.mxu0 0.0
    %570 = vmatpush1.msra.mxu0 0.0
    %571 = vmatprep.subr.mxu0 0.0
    %572 = vmatpush1.msra.mxu0 0.0
    %573 = vmatprep.subr.mxu0 0.0
    %574 = vmatpush1.msra.mxu0 0.0
    %575 = vmatprep.subr.mxu0 0.0
    %576 = vmatpush1.msra.mxu0 0.0
    %577 = vmatprep.subr.mxu0 0.0
    %578 = vmatpush1.msra.mxu0 0.0
    %579 = vmatprep.subr.mxu0 0.0
    %580 = vmatpush1.msra.mxu0 0.0
    %581 = vmatprep.subr.mxu0 0.0
    %582 = vmatpush1.msra.mxu0 0.0
    %583 = vmatprep.subr.mxu0 0.0
    %584 = vmatpush1.msra.mxu0 0.0
    %585 = vmatprep.subr.mxu0 0.0
    %586 = vmatpush1.msra.mxu0 0.0
    %587 = vmatprep.subr.mxu0 0.0
    %588 = vmatpush1.msra.mxu0 0.0
    %589 = vmatprep.subr.mxu0 0.0
    %590 = vmatpush1.msra.mxu0 0.0
    %591 = vmatprep.subr.mxu0 0.0
    %592 = vmatpush1.msra.mxu0 0.0
    %593 = vmatprep.subr.mxu0 0.0
    %594 = vmatpush1.msra.mxu0 0.0
    %595 = vmatprep.subr.mxu0 0.0
    %596 = vmatpush1.msra.mxu0 0.0
    %597 = vmatprep.subr.mxu0 0.0
    %598 = vmatpush1.msra.mxu0 0.0
    %599 = vmatprep.subr.mxu0 0.0
    %600 = vmatpush1.msra.mxu0 0.0
    %601 = vmatprep.subr.mxu0 0.0
    %602 = vmatpush1.msra.mxu0 0.0
    %603 = vmatprep.subr.mxu0 0.0
    %604 = vmatpush1.msra.mxu0 0.0
    %605 = vmatprep.subr.mxu0 0.0
    %606 = vmatpush1.msra.mxu0 0.0
    %607 = vmatprep.subr.mxu0 0.0
    %608 = vmatpush1.msra.mxu0 0.0
    %609 = vmatprep.subr.mxu0 0.0
    %610 = vmatpush1.msra.mxu0 0.0
    %611 = vmatprep.subr.mxu0 0.0
    %612 = vmatpush1.msra.mxu0 0.0
    %613 = vmatprep.subr.mxu0 0.0
    %614 = vmatpush1.msra.mxu0 0.0
    %615 = vmatprep.subr.mxu0 0.0
    %616 = vmatpush1.msra.mxu0 0.0
    %617 = vmatprep.subr.mxu0 0.0
    %618 = vmatpush1.msra.mxu0 0.0
    %619 = vmatprep.subr.mxu0 0.0
    %620 = vmatpush1.msra.mxu0 0.0
    %621 = vmatprep.mubr.f32.mxu0 0.0
    %622 = vmatmul.mubr.f32.gmra.mrb[0].mxu0 %v382
    %v623 = vpop.f32.mrb[0].mxu0
    %v624 = vadd.f32 %v556, %v623
    %v625 = vpop.f32.mrb[0].mxu0
    %626 = vmatprep.mubr.f32.mxu0 0.0
    %627 = vmatmul.mubr.f32.gmra.mrb[0].mxu0 %v385
    %v628 = vpop.f32.mrb[0].mxu0
    %v629 = vadd.f32 %v556, %v628
    %v630 = vpop.f32.mrb[0].mxu0
    %631 = vdwg.mxu0
    %v633 = vsel %vm332, %v454, 0
    %v636 = vsel %vm332, %v459, 0
    %v639 = vsel %vm332, %v539, 0
    %v642 = vsel %vm332, %v544, 0
    %644 = vmatprep.subr.mxu0 0.0
    %645 = vmatpush1.xpose.msra.mxu0 %v639
    %646 = vmatprep.subr.mxu0 0.0
    %647 = vmatpush1.xpose.msra.mxu0 %v642
    %648 = vmatprep.subr.mxu0 0.0
    %649 = vmatpush1.xpose.msra.mxu0 0.0
    %650 = vmatprep.subr.mxu0 0.0
    %651 = vmatpush1.xpose.msra.mxu0 0.0
    %652 = vmatprep.subr.mxu0 0.0
    %653 = vmatpush1.xpose.msra.mxu0 0.0
    %654 = vmatprep.subr.mxu0 0.0
    %655 = vmatpush1.xpose.msra.mxu0 0.0
    %656 = vmatprep.subr.mxu0 0.0
    %657 = vmatpush1.xpose.msra.mxu0 0.0
    %658 = vmatprep.subr.mxu0 0.0
    %659 = vmatpush1.xpose.msra.mxu0 0.0
    %660 = vmatprep.subr.mxu0 0.0
    %661 = vmatpush1.xpose.msra.mxu0 0.0
    %662 = vmatprep.subr.mxu0 0.0
    %663 = vmatpush1.xpose.msra.mxu0 0.0
    %664 = vmatprep.subr.mxu0 0.0
    %665 = vmatpush1.xpose.msra.mxu0 0.0
    %666 = vmatprep.subr.mxu0 0.0
    %667 = vmatpush1.xpose.msra.mxu0 0.0
    %668 = vmatprep.subr.mxu0 0.0
    %669 = vmatpush1.xpose.msra.mxu0 0.0
    %670 = vmatprep.subr.mxu0 0.0
    %671 = vmatpush1.xpose.msra.mxu0 0.0
    %672 = vmatprep.subr.mxu0 0.0
    %673 = vmatpush1.xpose.msra.mxu0 0.0
    %674 = vmatprep.subr.mxu0 0.0
    %675 = vmatpush1.xpose.msra.mxu0 0.0
    %676 = vmatprep.subr.mxu0 0.0
    %677 = vmatpush1.xpose.msra.mxu0 0.0
    %678 = vmatprep.subr.mxu0 0.0
    %679 = vmatpush1.xpose.msra.mxu0 0.0
    %680 = vmatprep.subr.mxu0 0.0
    %681 = vmatpush1.xpose.msra.mxu0 0.0
    %682 = vmatprep.subr.mxu0 0.0
    %683 = vmatpush1.xpose.msra.mxu0 0.0
    %684 = vmatprep.subr.mxu0 0.0
    %685 = vmatpush1.xpose.msra.mxu0 0.0
    %686 = vmatprep.subr.mxu0 0.0
    %687 = vmatpush1.xpose.msra.mxu0 0.0
    %688 = vmatprep.subr.mxu0 0.0
    %689 = vmatpush1.xpose.msra.mxu0 0.0
    %690 = vmatprep.subr.mxu0 0.0
    %691 = vmatpush1.xpose.msra.mxu0 0.0
    %692 = vmatprep.subr.mxu0 0.0
    %693 = vmatpush1.xpose.msra.mxu0 0.0
    %694 = vmatprep.subr.mxu0 0.0
    %695 = vmatpush1.xpose.msra.mxu0 0.0
    %696 = vmatprep.subr.mxu0 0.0
    %697 = vmatpush1.xpose.msra.mxu0 0.0
    %698 = vmatprep.subr.mxu0 0.0
    %699 = vmatpush1.xpose.msra.mxu0 0.0
    %700 = vmatprep.subr.mxu0 0.0
    %701 = vmatpush1.xpose.msra.mxu0 0.0
    %702 = vmatprep.subr.mxu0 0.0
    %703 = vmatpush1.xpose.msra.mxu0 0.0
    %704 = vmatprep.subr.mxu0 0.0
    %705 = vmatpush1.xpose.msra.mxu0 0.0
    %706 = vmatprep.subr.mxu0 0.0
    %707 = vmatpush1.xpose.msra.mxu0 0.0
    %708 = vmatprep.mubr.f32.mxu0 0.0
    %709 = vmatmul.mubr.f32.gmra.mrb[0].mxu0 %v633
    %v710 = vpop.f32.mrb[0].mxu0
    %v711 = vadd.f32 0.0, %v710
    %v712 = vpop.f32.mrb[0].mxu0
    %713 = vmatprep.mubr.f32.mxu0 0.0
    %714 = vmatmul.mubr.f32.gmra.mrb[0].mxu0 %v636
    %v715 = vpop.f32.mrb[0].mxu0
    %v716 = vadd.f32 0.0, %v715
    %v717 = vpop.f32.mrb[0].mxu0
    %718 = vdwg.mxu0
    %v719 = vmul.f32 %v711, 0.17677669
    %v720 = vmul.f32 %v716, 0.17677669
    %v721 = vld [vmem:[%s5] sm:$0xff]
    %v722 = vld [vmem:[%s5 + $0x8] sm:$0xff]
    %v723 = vadd.f32 %v719, %v721
    %v724 = vadd.f32 %v720, %v722
    %v725 = vld [vmem:[%s1] sm:$0x1]
    %vm726 = vcmp.ne.f32.partialorder %v725, 0.0
    %v727 = vsel %vm726, 0.0, -1e+09
    %v729 = vlaneseq
    %v730 = vshrl.u32 %v729, 7
    %v731 = vsub.s32 0, %v730
    %v732 = vrot.slane %v727, %v731
    %v734 = vadd.f32 %v723, %v732
    %v735 = vadd.f32 %v724, %v732
    %vm736 = vcmask 130048
    %v737 = vsel %vm736, %v734, -inf
    %738 = vmax.xlane.f32.xlu0 %v737
    %v739 = vpop.xlane.xlu0 %738
    %v740 = vsel %vm736, %v735, -inf
    %741 = vmax.xlane.f32.xlu0 %v740
    %v742 = vpop.xlane.xlu0 %741
    %v743 = vsub.f32 %v734, %v739
    %v744 = vsub.f32 %v735, %v742
    %v745 = vmul.f32 %v743, 1.442695
    %v746 = vpow.pop %v745
    %v747 = vmul.f32 %v744, 1.442695
    %v748 = vpow.pop %v747
    %v749 = vsel %vm736, %v746, 0.0
    %750 = vadd.xlane.f32.xlu0 %v749
    %v751 = vpop.xlane.xlu0 %750
    %v752 = vsel %vm736, %v748, 0.0
    %753 = vadd.xlane.f32.xlu0 %v752
    %v754 = vpop.xlane.xlu0 %753
    %v755 = vrcp.pop %v751
    %v756 = vrcp.pop %v754
    %v757 = vmul.f32 %v746, %v755
    %v758 = vmul.f32 %v748, %v756
    %v760 = vsel %vm736, %v757, 0
    %v763 = vsel %vm736, %v758, 0
    %765 = vmatprep.subr.mxu0 0.0
    %766 = vmatpush1.msra.mxu0 %v624
    %767 = vmatprep.subr.mxu0 0.0
    %768 = vmatpush1.msra.mxu0 %v629
    %769 = vmatprep.subr.mxu0 0.0
    %770 = vmatpush1.msra.mxu0 0.0
    %771 = vmatprep.subr.mxu0 0.0
    %772 = vmatpush1.msra.mxu0 0.0
    %773 = vmatprep.subr.mxu0 0.0
    %774 = vmatpush1.msra.mxu0 0.0
    %775 = vmatprep.subr.mxu0 0.0
    %776 = vmatpush1.msra.mxu0 0.0
    %777 = vmatprep.subr.mxu0 0.0
    %778 = vmatpush1.msra.mxu0 0.0
    %779 = vmatprep.subr.mxu0 0.0
    %780 = vmatpush1.msra.mxu0 0.0
    %781 = vmatprep.subr.mxu0 0.0
    %782 = vmatpush1.msra.mxu0 0.0
    %783 = vmatprep.subr.mxu0 0.0
    %784 = vmatpush1.msra.mxu0 0.0
    %785 = vmatprep.subr.mxu0 0.0
    %786 = vmatpush1.msra.mxu0 0.0
    %787 = vmatprep.subr.mxu0 0.0
    %788 = vmatpush1.msra.mxu0 0.0
    %789 = vmatprep.subr.mxu0 0.0
    %790 = vmatpush1.msra.mxu0 0.0
    %791 = vmatprep.subr.mxu0 0.0
    %792 = vmatpush1.msra.mxu0 0.0
    %793 = vmatprep.subr.mxu0 0.0
    %794 = vmatpush1.msra.mxu0 0.0
    %795 = vmatprep.subr.mxu0 0.0
    %796 = vmatpush1.msra.mxu0 0.0
    %797 = vmatprep.subr.mxu0 0.0
    %798 = vmatpush1.msra.mxu0 0.0
    %799 = vmatprep.subr.mxu0 0.0
    %800 = vmatpush1.msra.mxu0 0.0
    %801 = vmatprep.subr.mxu0 0.0
    %802 = vmatpush1.msra.mxu0 0.0
    %803 = vmatprep.subr.mxu0 0.0
    %804 = vmatpush1.msra.mxu0 0.0
    %805 = vmatprep.subr.mxu0 0.0
    %806 = vmatpush1.msra.mxu0 0.0
    %807 = vmatprep.subr.mxu0 0.0
    %808 = vmatpush1.msra.mxu0 0.0
    %809 = vmatprep.subr.mxu0 0.0
    %810 = vmatpush1.msra.mxu0 0.0
    %811 = vmatprep.subr.mxu0 0.0
    %812 = vmatpush1.msra.mxu0 0.0
    %813 = vmatprep.subr.mxu0 0.0
    %814 = vmatpush1.msra.mxu0 0.0
    %815 = vmatprep.subr.mxu0 0.0
    %816 = vmatpush1.msra.mxu0 0.0
    %817 = vmatprep.subr.mxu0 0.0
    %818 = vmatpush1.msra.mxu0 0.0
    %819 = vmatprep.subr.mxu0 0.0
    %820 = vmatpush1.msra.mxu0 0.0
    %821 = vmatprep.subr.mxu0 0.0
    %822 = vmatpush1.msra.mxu0 0.0
    %823 = vmatprep.subr.mxu0 0.0
    %824 = vmatpush1.msra.mxu0 0.0
    %825 = vmatprep.subr.mxu0 0.0
    %826 = vmatpush1.msra.mxu0 0.0
    %827 = vmatprep.subr.mxu0 0.0
    %828 = vmatpush1.msra.mxu0 0.0
    %829 = vmatprep.mubr.f32.mxu0 0.0
    %830 = vmatmul.mubr.f32.gmra.mrb[0].mxu0 %v760
    %v831 = vpop.f32.mrb[0].mxu0
    %v832 = vadd.f32 0.0, %v831
    %v833 = vpop.f32.mrb[0].mxu0
    %834 = vmatprep.mubr.f32.mxu0 0.0
    %835 = vmatmul.mubr.f32.gmra.mrb[0].mxu0 %v763
    %v836 = vpop.f32.mrb[0].mxu0
    %v837 = vadd.f32 0.0, %v836
    %v838 = vpop.f32.mrb[0].mxu0
    %839 = vdwg.mxu0
    %s840 = scalar_lea.vmem %s7, 96
    %v841 = vld [vmem:[%s840] sm:$0xff]
    %v842 = vld [vmem:[%s840 + $0x8] sm:$0xff]
    %v843 = vld [vmem:[%s840 + $0x10] sm:$0xff]
    %v844 = vld [vmem:[%s840 + $0x18] sm:$0xff]
    %v845 = vld [vmem:[%s8 + $0x3] sm:$0x1]
    %v846 = vlaneseq
    %v847 = vshrl.u32 %v846, 7
    %v848 = vsub.s32 0, %v847
    %v849 = vrot.slane %v845, %v848
    %v851 = vsel %vm332, %v832, 0
    %v854 = vsel %vm332, %v837, 0
    %856 = vmatprep.subr.mxu0 0.0
    %857 = vmatpush1.msra.mxu0 %v841
    %858 = vmatprep.subr.mxu0 0.0
    %859 = vmatpush1.msra.mxu0 %v842
    %860 = vmatprep.subr.mxu0 0.0
    %861 = vmatpush1.msra.mxu0 %v843
    %862 = vmatprep.subr.mxu0 0.0
    %863 = vmatpush1.msra.mxu0 %v844
    %864 = vmatprep.subr.mxu0 0.0
    %865 = vmatpush1.msra.mxu0 0.0
    %866 = vmatprep.subr.mxu0 0.0
    %867 = vmatpush1.msra.mxu0 0.0
    %868 = vmatprep.subr.mxu0 0.0
    %869 = vmatpush1.msra.mxu0 0.0
    %870 = vmatprep.subr.mxu0 0.0
    %871 = vmatpush1.msra.mxu0 0.0
    %872 = vmatprep.subr.mxu0 0.0
    %873 = vmatpush1.msra.mxu0 0.0
    %874 = vmatprep.subr.mxu0 0.0
    %875 = vmatpush1.msra.mxu0 0.0
    %876 = vmatprep.subr.mxu0 0.0
    %877 = vmatpush1.msra.mxu0 0.0
    %878 = vmatprep.subr.mxu0 0.0
    %879 = vmatpush1.msra.mxu0 0.0
    %880 = vmatprep.subr.mxu0 0.0
    %881 = vmatpush1.msra.mxu0 0.0
    %882 = vmatprep.subr.mxu0 0.0
    %883 = vmatpush1.msra.mxu0 0.0
    %884 = vmatprep.subr.mxu0 0.0
    %885 = vmatpush1.msra.mxu0 0.0
    %886 = vmatprep.subr.mxu0 0.0
    %887 = vmatpush1.msra.mxu0 0.0
    %888 = vmatprep.subr.mxu0 0.0
    %889 = vmatpush1.msra.mxu0 0.0
    %890 = vmatprep.subr.mxu0 0.0
    %891 = vmatpush1.msra.mxu0 0.0
    %892 = vmatprep.subr.mxu0 0.0
    %893 = vmatpush1.msra.mxu0 0.0
    %894 = vmatprep.subr.mxu0 0.0
    %895 = vmatpush1.msra.mxu0 0.0
    %896 = vmatprep.subr.mxu0 0.0
    %897 = vmatpush1.msra.mxu0 0.0
    %898 = vmatprep.subr.mxu0 0.0
    %899 = vmatpush1.msra.mxu0 0.0
    %900 = vmatprep.subr.mxu0 0.0
    %901 = vmatpush1.msra.mxu0 0.0
    %902 = vmatprep.subr.mxu0 0.0
    %903 = vmatpush1.msra.mxu0 0.0
    %904 = vmatprep.subr.mxu0 0.0
    %905 = vmatpush1.msra.mxu0 0.0
    %906 = vmatprep.subr.mxu0 0.0
    %907 = vmatpush1.msra.mxu0 0.0
    %908 = vmatprep.subr.mxu0 0.0
    %909 = vmatpush1.msra.mxu0 0.0
    %910 = vmatprep.subr.mxu0 0.0
    %911 = vmatpush1.msra.mxu0 0.0
    %912 = vmatprep.subr.mxu0 0.0
    %913 = vmatpush1.msra.mxu0 0.0
    %914 = vmatprep.subr.mxu0 0.0
    %915 = vmatpush1.msra.mxu0 0.0
    %916 = vmatprep.subr.mxu0 0.0
    %917 = vmatpush1.msra.mxu0 0.0
    %918 = vmatprep.subr.mxu0 0.0
    %919 = vmatpush1.msra.mxu0 0.0
    %920 = vmatprep.mubr.f32.mxu0 0.0
    %921 = vmatmul.mubr.f32.gmra.mrb[0].mxu0 %v851
    %v922 = vpop.f32.mrb[0].mxu0
    %v923 = vadd.f32 %v849, %v922
    %v924 = vpop.f32.mrb[0].mxu0
    %925 = vmatprep.mubr.f32.mxu0 0.0
    %926 = vmatmul.mubr.f32.gmra.mrb[0].mxu0 %v854
    %v927 = vpop.f32.mrb[0].mxu0
    %v928 = vadd.f32 %v849, %v927
    %v929 = vpop.f32.mrb[0].mxu0
    %930 = vdwg.mxu0
    %v931 = vadd.f32 %v370, %v923
    %v932 = vadd.f32 %v371, %v928
    %v933 = vld [vmem:[%s13 + $0x1] sm:$0x1]
    %v934 = vld [vmem:[%s13 + $0x4] sm:$0x1]
    %v935 = vsel %vm332, %v931, 0.0
    %936 = vadd.xlane.f32.xlu0 %v935
    %v937 = vpop.xlane.xlu0 %936
    %v938 = vsel %vm332, %v932, 0.0
    %939 = vadd.xlane.f32.xlu0 %v938
    %v940 = vpop.xlane.xlu0 %939
    %v941 = vmul.f32 %v937, %v339
    %v942 = vmul.f32 %v940, %v339
    %v943 = vsub.f32 %v931, %v941
    %v944 = vsub.f32 %v932, %v942
    %v945 = vmul.f32 %v943, %v943
    %v946 = vmul.f32 %v944, %v944
    %v947 = vsel %vm332, %v945, 0.0
    %948 = vadd.xlane.f32.xlu0 %v947
    %v949 = vpop.xlane.xlu0 %948
    %v950 = vsel %vm332, %v946, 0.0
    %951 = vadd.xlane.f32.xlu0 %v950
    %v952 = vpop.xlane.xlu0 %951
    %v953 = vmul.f32 %v949, %v339
    %v954 = vmul.f32 %v952, %v339
    %v955 = vadd.f32 %v953, 1e-12
    %v956 = vadd.f32 %v954, 1e-12
    %v957 = vrsqrt.pop %v955
    %v958 = vrsqrt.pop %v956
    %v959 = vmul.f32 %v943, %v957
    %v960 = vmul.f32 %v944, %v958
    %v961 = vlaneseq
    %v962 = vshrl.u32 %v961, 7
    %v963 = vsub.s32 0, %v962
    %v964 = vrot.slane %v933, %v963
    %v965 = vmul.f32 %v959, %v964
    %v966 = vmul.f32 %v960, %v964
    %v967 = vlaneseq
    %v968 = vshrl.u32 %v967, 7
    %v969 = vsub.s32 0, %v968
    %v970 = vrot.slane %v934, %v969
    %v971 = vadd.f32 %v965, %v970
    %v972 = vadd.f32 %v966, %v970
    %v973 = vld [vmem:[%s9] sm:$0xff]
    %v974 = vld [vmem:[%s9 + $0x8] sm:$0xff]
    %v975 = vld [vmem:[%s9 + $0x10] sm:$0xff]
    %v976 = vld [vmem:[%s9 + $0x18] sm:$0xff]
    %v977 = vld [vmem:[%s10] sm:$0x1]
    %v979 = vlaneseq
    %v980 = vshrl.u32 %v979, 7
    %v981 = vsub.s32 0, %v980
    %v982 = vrot.slane %v977, %v981
    %v985 = vsel %vm332, %v971, 0
    %v988 = vsel %vm332, %v972, 0
    %990 = vmatprep.subr.mxu0 0.0
    %991 = vmatpush1.msra.mxu0 %v973
    %992 = vmatprep.subr.mxu0 0.0
    %993 = vmatpush1.msra.mxu0 %v974
    %994 = vmatprep.subr.mxu0 0.0
    %995 = vmatpush1.msra.mxu0 %v975
    %996 = vmatprep.subr.mxu0 0.0
    %997 = vmatpush1.msra.mxu0 %v976
    %998 = vmatprep.subr.mxu0 0.0
    %999 = vmatpush1.msra.mxu0 0.0
    %1000 = vmatprep.subr.mxu0 0.0
    %1001 = vmatpush1.msra.mxu0 0.0
    %1002 = vmatprep.subr.mxu0 0.0
    %1003 = vmatpush1.msra.mxu0 0.0
    %1004 = vmatprep.subr.mxu0 0.0
    %1005 = vmatpush1.msra.mxu0 0.0
    %1006 = vmatprep.subr.mxu0 0.0
    %1007 = vmatpush1.msra.mxu0 0.0
    %1008 = vmatprep.subr.mxu0 0.0
    %1009 = vmatpush1.msra.mxu0 0.0
    %1010 = vmatprep.subr.mxu0 0.0
    %1011 = vmatpush1.msra.mxu0 0.0
    %1012 = vmatprep.subr.mxu0 0.0
    %1013 = vmatpush1.msra.mxu0 0.0
    %1014 = vmatprep.subr.mxu0 0.0
    %1015 = vmatpush1.msra.mxu0 0.0
    %1016 = vmatprep.subr.mxu0 0.0
    %1017 = vmatpush1.msra.mxu0 0.0
    %1018 = vmatprep.subr.mxu0 0.0
    %1019 = vmatpush1.msra.mxu0 0.0
    %1020 = vmatprep.subr.mxu0 0.0
    %1021 = vmatpush1.msra.mxu0 0.0
    %1022 = vmatprep.subr.mxu0 0.0
    %1023 = vmatpush1.msra.mxu0 0.0
    %1024 = vmatprep.subr.mxu0 0.0
    %1025 = vmatpush1.msra.mxu0 0.0
    %1026 = vmatprep.subr.mxu0 0.0
    %1027 = vmatpush1.msra.mxu0 0.0
    %1028 = vmatprep.subr.mxu0 0.0
    %1029 = vmatpush1.msra.mxu0 0.0
    %1030 = vmatprep.subr.mxu0 0.0
    %1031 = vmatpush1.msra.mxu0 0.0
    %1032 = vmatprep.subr.mxu0 0.0
    %1033 = vmatpush1.msra.mxu0 0.0
    %1034 = vmatprep.subr.mxu0 0.0
    %1035 = vmatpush1.msra.mxu0 0.0
    %1036 = vmatprep.subr.mxu0 0.0
    %1037 = vmatpush1.msra.mxu0 0.0
    %1038 = vmatprep.subr.mxu0 0.0
    %1039 = vmatpush1.msra.mxu0 0.0
    %1040 = vmatprep.subr.mxu0 0.0
    %1041 = vmatpush1.msra.mxu0 0.0
    %1042 = vmatprep.subr.mxu0 0.0
    %1043 = vmatpush1.msra.mxu0 0.0
    %1044 = vmatprep.subr.mxu0 0.0
    %1045 = vmatpush1.msra.mxu0 0.0
    %1046 = vmatprep.subr.mxu0 0.0
    %1047 = vmatpush1.msra.mxu0 0.0
    %1048 = vmatprep.subr.mxu0 0.0
    %1049 = vmatpush1.msra.mxu0 0.0
    %1050 = vmatprep.subr.mxu0 0.0
    %1051 = vmatpush1.msra.mxu0 0.0
    %1052 = vmatprep.subr.mxu0 0.0
    %1053 = vmatpush1.msra.mxu0 0.0
    %1054 = vmatprep.mubr.f32.mxu0 0.0
    %1055 = vmatmul.mubr.f32.gmra.mrb[0].mxu0 %v985
    %v1056 = vpop.f32.mrb[0].mxu0
    %v1057 = vadd.f32 %v982, %v1056
    %v1058 = vpop.f32.mrb[0].mxu0
    %1059 = vmatprep.mubr.f32.mxu0 0.0
    %1060 = vmatmul.mubr.f32.gmra.mrb[0].mxu0 %v988
    %v1061 = vpop.f32.mrb[0].mxu0
    %v1062 = vadd.f32 %v982, %v1061
    %v1063 = vpop.f32.mrb[0].mxu0
    %1064 = vdwg.mxu0
    %v1065 = vmul.f32 %v1057, %v1057
    %v1066 = vmul.f32 %v1062, %v1062
    %v1067 = vmul.f32 %v1057, %v1065
    %v1068 = vmul.f32 %v1062, %v1066
    %v1069 = vmul.f32 %v1067, 0.044715
    %v1070 = vmul.f32 %v1068, 0.044715
    %v1071 = vadd.f32 %v1057, %v1069
    %v1072 = vadd.f32 %v1062, %v1070
    %v1073 = vmul.f32 %v1071, 0.7978846
    %v1074 = vmul.f32 %v1072, 0.7978846
    %v1075 = vtanh.pop %v1073
    %v1076 = vtanh.pop %v1074
    %v1077 = vadd.f32 %v1075, 1.0
    %v1078 = vadd.f32 %v1076, 1.0
    %v1079 = vmul.f32 %v1077, 0.5
    %v1080 = vmul.f32 %v1078, 0.5
    %v1081 = vmul.f32 %v1057, %v1079
    %v1082 = vmul.f32 %v1062, %v1080
    %v1083 = vld [vmem:[%s11] sm:$0xff]
    %v1084 = vld [vmem:[%s11 + $0x8] sm:$0xff]
    %v1085 = vld [vmem:[%s11 + $0x10] sm:$0xff]
    %v1086 = vld [vmem:[%s11 + $0x18] sm:$0xff]
    %v1087 = vld [vmem:[%s11 + $0x20] sm:$0xff]
    %v1088 = vld [vmem:[%s11 + $0x28] sm:$0xff]
    %v1089 = vld [vmem:[%s11 + $0x30] sm:$0xff]
    %v1090 = vld [vmem:[%s11 + $0x38] sm:$0xff]
    %v1091 = vld [vmem:[%s12] sm:$0x1]
    %v1093 = vlaneseq
    %v1094 = vshrl.u32 %v1093, 7
    %v1095 = vsub.s32 0, %v1094
    %v1096 = vrot.slane %v1091, %v1095
    %vm1098 = vcmask 523264
    %v1100 = vsel %vm1098, %v1081, 0
    %v1103 = vsel %vm1098, %v1082, 0
    %1105 = vmatprep.subr.mxu0 0.0
    %1106 = vmatpush1.msra.mxu0 %v1083
    %1107 = vmatprep.subr.mxu0 0.0
    %1108 = vmatpush1.msra.mxu0 %v1084
    %1109 = vmatprep.subr.mxu0 0.0
    %1110 = vmatpush1.msra.mxu0 %v1085
    %1111 = vmatprep.subr.mxu0 0.0
    %1112 = vmatpush1.msra.mxu0 %v1086
    %1113 = vmatprep.subr.mxu0 0.0
    %1114 = vmatpush1.msra.mxu0 %v1087
    %1115 = vmatprep.subr.mxu0 0.0
    %1116 = vmatpush1.msra.mxu0 %v1088
    %1117 = vmatprep.subr.mxu0 0.0
    %1118 = vmatpush1.msra.mxu0 %v1089
    %1119 = vmatprep.subr.mxu0 0.0
    %1120 = vmatpush1.msra.mxu0 %v1090
    %1121 = vmatprep.subr.mxu0 0.0
    %1122 = vmatpush1.msra.mxu0 0.0
    %1123 = vmatprep.subr.mxu0 0.0
    %1124 = vmatpush1.msra.mxu0 0.0
    %1125 = vmatprep.subr.mxu0 0.0
    %1126 = vmatpush1.msra.mxu0 0.0
    %1127 = vmatprep.subr.mxu0 0.0
    %1128 = vmatpush1.msra.mxu0 0.0
    %1129 = vmatprep.subr.mxu0 0.0
    %1130 = vmatpush1.msra.mxu0 0.0
    %1131 = vmatprep.subr.mxu0 0.0
    %1132 = vmatpush1.msra.mxu0 0.0
    %1133 = vmatprep.subr.mxu0 0.0
    %1134 = vmatpush1.msra.mxu0 0.0
    %1135 = vmatprep.subr.mxu0 0.0
    %1136 = vmatpush1.msra.mxu0 0.0
    %1137 = vmatprep.subr.mxu0 0.0
    %1138 = vmatpush1.msra.mxu0 0.0
    %1139 = vmatprep.subr.mxu0 0.0
    %1140 = vmatpush1.msra.mxu0 0.0
    %1141 = vmatprep.subr.mxu0 0.0
    %1142 = vmatpush1.msra.mxu0 0.0
    %1143 = vmatprep.subr.mxu0 0.0
    %1144 = vmatpush1.msra.mxu0 0.0
    %1145 = vmatprep.subr.mxu0 0.0
    %1146 = vmatpush1.msra.mxu0 0.0
    %1147 = vmatprep.subr.mxu0 0.0
    %1148 = vmatpush1.msra.mxu0 0.0
    %1149 = vmatprep.subr.mxu0 0.0
    %1150 = vmatpush1.msra.mxu0 0.0
    %1151 = vmatprep.subr.mxu0 0.0
    %1152 = vmatpush1.msra.mxu0 0.0
    %1153 = vmatprep.subr.mxu0 0.0
    %1154 = vmatpush1.msra.mxu0 0.0
    %1155 = vmatprep.subr.mxu0 0.0
    %1156 = vmatpush1.msra.mxu0 0.0
    %1157 = vmatprep.subr.mxu0 0.0
    %1158 = vmatpush1.msra.mxu0 0.0
    %1159 = vmatprep.subr.mxu0 0.0
    %1160 = vmatpush1.msra.mxu0 0.0
    %1161 = vmatprep.subr.mxu0 0.0
    %1162 = vmatpush1.msra.mxu0 0.0
    %1163 = vmatprep.subr.mxu0 0.0
    %1164 = vmatpush1.msra.mxu0 0.0
    %1165 = vmatprep.subr.mxu0 0.0
    %1166 = vmatpush1.msra.mxu0 0.0
    %1167 = vmatprep.subr.mxu0 0.0
    %1168 = vmatpush1.msra.mxu0 0.0
    %1169 = vmatprep.mubr.f32.mxu0 0.0
    %1170 = vmatmul.mubr.f32.gmra.mrb[0].mxu0 %v1100
    %v1171 = vpop.f32.mrb[0].mxu0
    %v1172 = vadd.f32 %v1096, %v1171
    %v1173 = vpop.f32.mrb[0].mxu0
    %1174 = vmatprep.mubr.f32.mxu0 0.0
    %1175 = vmatmul.mubr.f32.gmra.mrb[0].mxu0 %v1103
    %v1176 = vpop.f32.mrb[0].mxu0
    %v1177 = vadd.f32 %v1096, %v1176
    %v1178 = vpop.f32.mrb[0].mxu0
    %1179 = vdwg.mxu0
    %v1180 = vadd.f32 %v971, %v1172
    %v1181 = vadd.f32 %v972, %v1177
    %v1182 = vld [vmem:[%s13 + $0x2] sm:$0x1]
    %v1183 = vld [vmem:[%s13 + $0x5] sm:$0x1]
    %v1184 = vsel %vm332, %v1180, 0.0
    %1185 = vadd.xlane.f32.xlu0 %v1184
    %v1186 = vpop.xlane.xlu0 %1185
    %v1187 = vsel %vm332, %v1181, 0.0
    %1188 = vadd.xlane.f32.xlu0 %v1187
    %v1189 = vpop.xlane.xlu0 %1188
    %v1190 = vmul.f32 %v1186, %v339
    %v1191 = vmul.f32 %v1189, %v339
    %v1192 = vsub.f32 %v1180, %v1190
    %v1193 = vsub.f32 %v1181, %v1191
    %v1194 = vmul.f32 %v1192, %v1192
    %v1195 = vmul.f32 %v1193, %v1193
    %v1196 = vsel %vm332, %v1194, 0.0
    %1197 = vadd.xlane.f32.xlu0 %v1196
    %v1198 = vpop.xlane.xlu0 %1197
    %v1199 = vsel %vm332, %v1195, 0.0
    %1200 = vadd.xlane.f32.xlu0 %v1199
    %v1201 = vpop.xlane.xlu0 %1200
    %v1202 = vmul.f32 %v1198, %v339
    %v1203 = vmul.f32 %v1201, %v339
    %v1204 = vadd.f32 %v1202, 1e-12
    %v1205 = vadd.f32 %v1203, 1e-12
    %v1206 = vrsqrt.pop %v1204
    %v1207 = vrsqrt.pop %v1205
    %v1208 = vmul.f32 %v1192, %v1206
    %v1209 = vmul.f32 %v1193, %v1207
    %v1210 = vlaneseq
    %v1211 = vshrl.u32 %v1210, 7
    %v1212 = vsub.s32 0, %v1211
    %v1213 = vrot.slane %v1182, %v1212
    %v1214 = vmul.f32 %v1208, %v1213
    %v1215 = vmul.f32 %v1209, %v1213
    %v1216 = vlaneseq
    %v1217 = vshrl.u32 %v1216, 7
    %v1218 = vsub.s32 0, %v1217
    %v1219 = vrot.slane %v1183, %v1218
    %v1220 = vadd.f32 %v1214, %v1219
    %v1221 = vadd.f32 %v1215, %v1219
    %v1222 = vmul.f32 %v1220, %v308
    %v1223 = vmul.f32 %v1221, %v313
    %v1224 = vsel %vm332, %v1222, 0.0
    %1225 = vadd.xlane.f32.xlu0 %v1224
    %v1226 = vpop.xlane.xlu0 %1225
    %v1227 = vsel %vm332, %v1223, 0.0
    %1228 = vadd.xlane.f32.xlu0 %v1227
    %v1229 = vpop.xlane.xlu0 %1228
    %v1230 = vmul.f32 %v1220, %v318
    %v1231 = vmul.f32 %v1221, %v323
    %v1232 = vsel %vm332, %v1230, 0.0
    %1233 = vadd.xlane.f32.xlu0 %v1232
    %v1234 = vpop.xlane.xlu0 %1233
    %v1235 = vsel %vm332, %v1231, 0.0
    %1236 = vadd.xlane.f32.xlu0 %v1235
    %v1237 = vpop.xlane.xlu0 %1236
    %v1238 = vld [vmem:[%s2] sm:$0xff]
    %v1239 = vld [vmem:[%s2 + $0x8] sm:$0xff]
    %vm1240 = vcmp.ne.f32.partialorder %v1238, 0.0
    %vm1241 = vcmp.ne.f32.partialorder %v1239, 0.0
    %v1242 = vsel %vm1240, 1, 0
    %v1243 = vsel %vm1241, 1, 0
    %v1244 = vcvt.s32.f32 %v1242
    %v1245 = vcvt.s32.f32 %v1243
    %v1246 = vsub.f32 0.0, %v1226
    %v1247 = vsub.f32 0.0, %v1229
    %v1248 = vmax.f32 %v1246, 0.0
    %v1249 = vmax.f32 %v1247, 0.0
    %v1250 = vand.u32 2147483647, %v1246
    %v1251 = vand.u32 2147483647, %v1247
    %v1252 = vsub.f32 0.0, %v1250
    %v1253 = vsub.f32 0.0, %v1251
    %v1254 = vmul.f32 %v1252, 1.442695
    %v1255 = vpow.pop %v1254
    %v1256 = vmul.f32 %v1253, 1.442695
    %v1257 = vpow.pop %v1256
    %v1258 = vadd.f32 %v1255, 1.0
    %v1259 = vadd.f32 %v1257, 1.0
    %v1260 = vlog2.pop %v1258
    %v1261 = vmul.f32 %v1260, 0.6931472
    %v1262 = vlog2.pop %v1259
    %v1263 = vmul.f32 %v1262, 0.6931472
    %v1264 = vadd.f32 %v1248, %v1261
    %v1265 = vadd.f32 %v1249, %v1263
    %v1266 = vmul.f32 %v1264, %v1244
    %v1267 = vmul.f32 %v1265, %v1245
    %vm1268 = vcmask 7168
    %v1269 = vsel %vm1268, %v1266, 0.0
    %v1270 = vsel %vm1268, %v1267, 0.0
    %v1271 = vadd.f32 %v1269, %v1270
    %v1272 = vrot.slane %v1271, 4
    %v1273 = vadd.f32 %v1271, %v1272
    %v1274 = vrot.slane %v1273, 2
    %v1275 = vadd.f32 %v1273, %v1274
    %v1276 = vrot.slane %v1275, 1
    %v1277 = vadd.f32 %v1275, %v1276
    %v1278 = vmax.f32 %v1234, 0.0
    %v1279 = vmax.f32 %v1237, 0.0
    %v1280 = vand.u32 2147483647, %v1234
    %v1281 = vand.u32 2147483647, %v1237
    %v1282 = vsub.f32 0.0, %v1280
    %v1283 = vsub.f32 0.0, %v1281
    %v1284 = vmul.f32 %v1282, 1.442695
    %v1285 = vpow.pop %v1284
    %v1286 = vmul.f32 %v1283, 1.442695
    %v1287 = vpow.pop %v1286
    %v1288 = vadd.f32 %v1285, 1.0
    %v1289 = vadd.f32 %v1287, 1.0
    %v1290 = vlog2.pop %v1288
    %v1291 = vmul.f32 %v1290, 0.6931472
    %v1292 = vlog2.pop %v1289
    %v1293 = vmul.f32 %v1292, 0.6931472
    %v1294 = vadd.f32 %v1278, %v1291
    %v1295 = vadd.f32 %v1279, %v1293
    %v1296 = vmul.f32 %v1294, %v1244
    %v1297 = vmul.f32 %v1295, %v1245
    %v1298 = vsel %vm1268, %v1296, 0.0
    %v1299 = vsel %vm1268, %v1297, 0.0
    %v1300 = vadd.f32 %v1298, %v1299
    %v1301 = vrot.slane %v1300, 4
    %v1302 = vadd.f32 %v1300, %v1301
    %v1303 = vrot.slane %v1302, 2
    %v1304 = vadd.f32 %v1302, %v1303
    %v1305 = vrot.slane %v1304, 1
    %v1306 = vadd.f32 %v1304, %v1305
    %v1307 = vsel %vm1268, %v1244, 0.0
    %v1308 = vsel %vm1268, %v1245, 0.0
    %v1309 = vadd.f32 %v1307, %v1308
    %v1310 = vrot.slane %v1309, 4
    %v1311 = vadd.f32 %v1309, %v1310
    %v1312 = vrot.slane %v1311, 2
    %v1313 = vadd.f32 %v1311, %v1312
    %v1314 = vrot.slane %v1313, 1
    %v1315 = vadd.f32 %v1313, %v1314
    %v1316 = vadd.f32 %v1277, %v1306
    %v1317 = vrcp.pop %v1315
    %v1318 = vmul.f32 %v1316, %v1317
    %vm1319 = vcmask 0
    %1320 = vst.msk [vmem:[#allocation2] sm:$0x1] %vm1319, %v1318
    // Predicated region
    $region58: #{model_forward.1} parent=1 // pred_check
      _
    $region59: #{model_forward.1} parent=1 // pred_check_branch
      %1322 = sbr.rel (0) target = $region61
    $region60: #{model_forward.1} parent=1 // pred_region
      %s1324 = ssub.s32 16, 16
      %1325 = vsyncadd [#allocation3], %s1324
      %s1327 = sshll.u32 [#allocation2], 4
      %s1328 = int_to_ptr.vmem [resolvable:$true] %s1327
      %1330 = dma.vmem_to_hbm [thread:$0]  %s1328, 16, %s14, [#allocation3]
    $region61: #{model_forward.1} parent=1 // pred_fallthru
      _
    // Predicated region
    $region62: #{model_forward.1} parent=1 // pred_check
      _
    $region63: #{model_forward.1} parent=1 // pred_check_branch
      %1332 = sbr.rel (0) target = $region65
    $region64: #{model_forward.1} parent=1 // pred_region
      %1333 = dma.done [#allocation3], 16
    $region65: #{model_forward.1} parent=1 // pred_fallthru
      _
    %1334 = vsyncpa [#allocation3], 1

</llo_original>
